<compile_context>
chip_gen: v7x
topology: tpu7x:2x2x1
jax: 0.10.0
libtpu: 0.0.40
codegen_flags: <defaults>
</compile_context>

<pallas_src>
import jax
import jax.numpy as jnp
from jax import lax
from jax.experimental import pallas as pl
from jax.experimental.pallas import tpu as pltpu


def _vmem_budget_bytes():
    """Generation-aware scoped-VMEM budget (v5e/v6e: 128 MiB phys, v7x: 64 MiB)."""
    try:
        info = pltpu.get_tpu_info()
        phys = int(getattr(info, "vmem_capacity_bytes", 0)) or (64 << 20)
    except Exception:
        phys = 64 << 20
    # use at most half of physical, capped -- leaves room for compiler temps.
    return int(min(phys // 2, 48 << 20))


def _pick_batch_block(B, L, C, L1, L1p, H1, K, P, KCp, vmem_budget):
    """Batch rows per grid step (B_blk * L1p becomes the matmul M dim)."""
    if B <= 8:
        return B                                    # one (small) block == whole batch
    # target M ~ 256 (fills v6e/v7x MXU; >=128 already fills v5e's 4x128^2 MXU).
    blk = max(8, -(-256 // max(L1p, 1)))
    blk = -(-blk // 8) * 8
    # total-VMEM budget per batch row: double-buffered bf16 x tile, bf16 patch,
    # f32 H1-wide working set (h), tiny per-tap scratch.
    per_row = (2 * L * C * 2) + (L1p * KCp * 2) + (L1p * H1 * 4) + (8 * (L1 + 2 * P) * 4)
    fixed = 2 * (KCp * H1 * 2 + H1 * 4 + K * H1 * 4 + 4)       # (double-buffered) weights
    avail = max(vmem_budget * 3 // 4 - fixed, per_row * 8)
    cap = max(8, (avail // per_row) // 8 * 8)
    blk = min(blk, cap)
    # guarantee >= 2 grid steps so both v7x TensorCores get work.
    half = max(8, (((B + 1) // 2) // 8) * 8)
    blk = min(blk, half)
    return max(8, (blk // 8) * 8)


def conv_pooling(x, w1, b1, w2, b2, padding):
    """x: [B, L, C]; w1: [K, C, 256] tap-major; b1: [256]; w2: [K, 256, 1]; b2: [1].
    Returns [B, 1] logits, matching ConvPooling.forward."""
    B, L, C = x.shape
    K, _, H1 = w1.shape
    P = padding
    L1 = L + 2 * P - K + 1                 # conv1 output length
    L2 = L1 + 2 * P - K + 1                # conv2 output length
    if L1 < 1 or L2 < 1:
        raise ValueError(f"degenerate config: conv output lengths L1={L1}, L2={L2}")
    KC = K * C
    KCp = -(-KC // 128) * 128              # lane-padded contraction (96 -> 128)
    L1p = -(-L1 // 8) * 8                  # sublane-aligned per-batch row count

    vmem_budget = _vmem_budget_bytes()
    B_blk = _pick_batch_block(B, L, C, L1, L1p, H1, K, P, KCp, vmem_budget)
    Bp = -(-B // B_blk) * B_blk

    x = x.astype(jnp.bfloat16)             # bf16 end-to-end: halves x DMA + patch traffic
    if Bp != B:                            # pad batch remainder (rows are independent)
        x = jnp.pad(x, ((0, Bp - B), (0, 0), (0, 0)))

    w1_flat = w1.reshape(KC, H1)
    if KCp != KC:                          # zero rows for the lane-padded contraction
        w1_flat = jnp.concatenate(
            [w1_flat, jnp.zeros((KCp - KC, H1), w1_flat.dtype)], axis=0)
    w1_flat = w1_flat.astype(jnp.bfloat16)
    b1_2d = b1.reshape(1, H1).astype(jnp.float32)
    w2_2d = w2.reshape(K, H1).astype(jnp.float32)       # conv2 runs on the VPU in f32
    b2_2d = b2.reshape(1, 1).astype(jnp.float32)

    def kernel(x_ref, w1_ref, b1_ref, w2_ref, b2_ref, out_ref, patch_ref, v_ref):
        # ---- conv1 as im2col: build bf16 (B_blk, L1p, KCp) patches in VMEM ----
        # Zero padding handled here: only the boundary rows of each tap's lane
        # block are zeroed; everything else is a shifted bf16 copy of x.
        for j in range(K):                  # K small & static -> unrolled
            lanes = pl.ds(j * C, C)
            t_lo = max(0, P - j)                           # first valid output row
            t_hi = min(L1, L + P - j)                      # one past the last valid row
            if t_lo > 0:
                patch_ref[:, pl.ds(0, t_lo), lanes] = jnp.zeros(
                    (B_blk, t_lo, C), jnp.bfloat16)
            if t_hi < L1:
                patch_ref[:, pl.ds(t_hi, L1 - t_hi), lanes] = jnp.zeros(
                    (B_blk, L1 - t_hi, C), jnp.bfloat16)
            if t_hi > t_lo:
                patch_ref[:, pl.ds(t_lo, t_hi - t_lo), lanes] = \
                    x_ref[:, pl.ds(t_lo + j - P, t_hi - t_lo), :]
        if KCp > KC:
            # Lane padding feeds the contraction (against zero weight rows): it
            # must be zeroed so stale-VMEM NaNs can't poison the f32 accumulate.
            patch_ref[:, :, pl.ds(KC, KCp - KC)] = jnp.zeros(
                (B_blk, L1p, KCp - KC), jnp.bfloat16)
        # Rows [L1, L1p) are intentionally left unwritten: a garbage LHS row only
        # affects its own output row, and those rows are sliced off below.

        # ---- single fused MXU matmul: [B_blk*L1p, KCp] @ [KCp, H1] ------------
        patches = patch_ref[...].reshape(B_blk * L1p, KCp)        # bf16, aligned
        h = jnp.dot(patches, w1_ref[...], preferred_element_type=jnp.float32)
        h = jnp.maximum(h + b1_ref[...], 0.0)          # bias + ReLU in f32 (VPU)
        h3 = h.reshape(B_blk, L1p, H1)                 # L1p % 8 == 0 -> clean relayout

        # ---- conv2 (H1 -> 1): per-tap VPU multiply + XLU lane-reduce on the ----
        # in-register h (no H1-wide scratch / re-reads); the time shift/add goes
        # through a tiny zero-padded (K, B_blk, L1+2P) scratch.
        if P > 0:
            v_ref[:, :, pl.ds(0, P)] = jnp.zeros((K, B_blk, P), jnp.float32)
            v_ref[:, :, pl.ds(P + L1, P)] = jnp.zeros((K, B_blk, P), jnp.float32)
        for j in range(K):
            w2j = w2_ref[pl.ds(j, 1), :].reshape(1, 1, H1)         # (1,1,H1) f32
            vj = jnp.sum(h3 * w2j, axis=-1)                        # (B_blk, L1p)
            v_ref[j, :, pl.ds(P, L1)] = vj[:, :L1]                 # drop padded rows
        z = jnp.zeros((B_blk, L2), jnp.float32)
        for j in range(K):
            z = z + v_ref[j, :, pl.ds(j, L2)]          # z[b,t] += v_j[b, t+j-P]

        # ---- max over time (+ constant conv2 bias) ----------------------------
        out_ref[...] = jnp.max(z, axis=-1, keepdims=True) + b2_ref[...]

    out = pl.pallas_call(
        kernel,
        out_shape=jax.ShapeDtypeStruct((Bp, 1), jnp.float32),
        grid_spec=pltpu.PrefetchScalarGridSpec(
            num_scalar_prefetch=0,
            grid=(Bp // B_blk,),
            in_specs=[
                pl.BlockSpec((B_blk, L, C), lambda i: (i, 0, 0)),
                pl.BlockSpec((KCp, H1), lambda i: (0, 0)),
                pl.BlockSpec((1, H1), lambda i: (0, 0)),
                pl.BlockSpec((K, H1), lambda i: (0, 0)),
                pl.BlockSpec((1, 1), lambda i: (0, 0)),
            ],
            # Per-step output block: the batch axis is truly parallel.
            out_specs=pl.BlockSpec((B_blk, 1), lambda i: (i, 0)),
            scratch_shapes=[
                pltpu.VMEM((B_blk, L1p, KCp), jnp.bfloat16),       # bf16 im2col patches
                pltpu.VMEM((K, B_blk, L1 + 2 * P), jnp.float32),   # tiny per-tap conv2 buf
            ],
        ),
        compiler_params=pltpu.CompilerParams(
            dimension_semantics=(pltpu.PARALLEL,),
            vmem_limit_bytes=vmem_budget),
    )(x, w1_flat, b1_2d, w2_2d, b2_2d)
    return out[:B]


def ref_forward(x, w1, b1, w2, b2, padding):
    """Pure-JAX f32 reference reproducing the PyTorch module (NCL convs)."""
    x_ncl = jnp.transpose(x, (0, 2, 1))                       # [B, C, L]
    wt1 = jnp.transpose(w1, (2, 1, 0))                        # [H1, C, K] (OIH)
    y = lax.conv_general_dilated(
        x_ncl, wt1, window_strides=(1,), padding=[(padding, padding)],
        dimension_numbers=("NCH", "OIH", "NCH"))
    y = jnp.maximum(y + b1[None, :, None], 0.0)               # [B, H1, L1]
    wt2 = jnp.transpose(w2, (2, 1, 0))                        # [1, H1, K]
    z = lax.conv_general_dilated(
        y, wt2, window_strides=(1,), padding=[(padding, padding)],
        dimension_numbers=("NCH", "OIH", "NCH"))
    z = z + b2[None, :, None]                                 # [B, 1, L2]
    return jnp.max(z, axis=2)                                 # [B, 1]


if __name__ == "__main__":
    # Small shapes consistent with the module: feature_size=32, kernel_size=3,
    # padding_size=1; hidden conv channels = 256 (fixed by the module).
    # B=20 exercises batch blocking (B_blk=8, grid=(3,), padded remainder).
    B, L, C = 20, 16, 32
    K, P, H1 = 3, 1, 256

    key = jax.random.PRNGKey(0)
    k1, k2, k3, k4, k5 = jax.random.split(key, 5)
    x = jax.random.normal(k1, (B, L, C), jnp.float32)
    w1 = jax.random.normal(k2, (K, C, H1), jnp.float32) * 0.05   # tap-major conv1
    b1 = jax.random.normal(k3, (H1,), jnp.float32) * 0.05
    w2 = jax.random.normal(k4, (K, H1, 1), jnp.float32) * 0.05   # tap-major conv2
    b2 = jax.random.normal(k5, (1,), jnp.float32) * 0.05

    out = conv_pooling(x, w1, b1, w2, b2, P)
    jax.block_until_ready(out)

    ref = ref_forward(x, w1, b1, w2, b2, P)
    assert out.shape == (B, 1), out.shape
    # conv1 runs with bf16 MXU inputs (f32 accumulate) -> bf16-appropriate
    # tolerance against the pure-f32 reference.
    assert jnp.allclose(out, ref, atol=2e-2, rtol=2e-2), (out, ref)

    print("KERNEL_OK")
</pallas_src>

<mosaic_0001>
module attributes {stable_mosaic.version = 11 : i64} {
  func.func @kernel(%arg0: i32, %arg1: memref<8x16x32xbf16, #tpu.memory_space<vmem>>, %arg2: memref<128x256xbf16, #tpu.memory_space<vmem>>, %arg3: memref<1x256xf32, #tpu.memory_space<vmem>>, %arg4: memref<3x256xf32, #tpu.memory_space<vmem>>, %arg5: memref<1x1xf32, #tpu.memory_space<vmem>>, %arg6: memref<8x1xf32, #tpu.memory_space<vmem>>, %arg7: memref<8x16x128xbf16, #tpu.memory_space<vmem>>, %arg8: memref<3x8x18xf32, #tpu.memory_space<vmem>>) attributes {dimension_semantics = [#tpu.dimension_semantics<parallel>], iteration_bounds = array<i64: 3>, scalar_prefetch = 0 : i64, scratch_operands = 2 : i64, tpu.core_type = #tpu.core_type<tc>, window_params = [{transform_indices = @transform_0, window_bounds = array<i64: 8, 16, 32>}, {pipeline_mode = #tpu.pipeline_mode<synchronous>, transform_indices = @transform_1, window_bounds = array<i64: 128, 256>}, {pipeline_mode = #tpu.pipeline_mode<synchronous>, transform_indices = @transform_2, window_bounds = array<i64: 1, 256>}, {pipeline_mode = #tpu.pipeline_mode<synchronous>, transform_indices = @transform_3, window_bounds = array<i64: 3, 256>}, {pipeline_mode = #tpu.pipeline_mode<synchronous>, transform_indices = @transform_4, window_bounds = array<i64: 1, 1>}, {transform_indices = @transform_5, window_bounds = array<i64: 8, 1>}]} {
    %cst = arith.constant 0.000000e+00 : bf16
    %0 = vector.broadcast %cst : bf16 to vector<8x1x32xbf16>
    %c0 = arith.constant 0 : index
    %c0_0 = arith.constant 0 : index
    %c0_1 = arith.constant 0 : index
    %1 = vector.load %arg7[%c0, %c0_0, %c0_1] : memref<8x16x128xbf16, #tpu.memory_space<vmem>>, vector<8x1x32xbf16>
    tpu.vector_store %arg7[%c0, %c0_0, %c0_1], %0 {strides = array<i32>} : memref<8x16x128xbf16, #tpu.memory_space<vmem>>, vector<8x1x32xbf16>,
    %c0_2 = arith.constant 0 : index
    %c0_3 = arith.constant 0 : index
    %c0_4 = arith.constant 0 : index
    %2 = vector.load %arg1[%c0_2, %c0_3, %c0_4] : memref<8x16x32xbf16, #tpu.memory_space<vmem>>, vector<8x15x32xbf16>
    %c0_5 = arith.constant 0 : index
    %c1 = arith.constant 1 : index
    %c0_6 = arith.constant 0 : index
    %3 = vector.load %arg7[%c0_5, %c1, %c0_6] : memref<8x16x128xbf16, #tpu.memory_space<vmem>>, vector<8x15x32xbf16>
    tpu.vector_store %arg7[%c0_5, %c1, %c0_6], %2 {strides = array<i32>} : memref<8x16x128xbf16, #tpu.memory_space<vmem>>, vector<8x15x32xbf16>,
    %c0_7 = arith.constant 0 : index
    %c0_8 = arith.constant 0 : index
    %c0_9 = arith.constant 0 : index
    %4 = vector.load %arg1[%c0_7, %c0_8, %c0_9] : memref<8x16x32xbf16, #tpu.memory_space<vmem>>, vector<8x16x32xbf16>
    %c0_10 = arith.constant 0 : index
    %c0_11 = arith.constant 0 : index
    %c32 = arith.constant 32 : index
    %5 = vector.load %arg7[%c0_10, %c0_11, %c32] : memref<8x16x128xbf16, #tpu.memory_space<vmem>>, vector<8x16x32xbf16>
    tpu.vector_store %arg7[%c0_10, %c0_11, %c32], %4 {strides = array<i32>} : memref<8x16x128xbf16, #tpu.memory_space<vmem>>, vector<8x16x32xbf16>,
    %cst_12 = arith.constant 0.000000e+00 : bf16
    %6 = vector.broadcast %cst_12 : bf16 to vector<8x1x32xbf16>
    %c0_13 = arith.constant 0 : index
    %c15 = arith.constant 15 : index
    %c64 = arith.constant 64 : index
    %7 = vector.load %arg7[%c0_13, %c15, %c64] : memref<8x16x128xbf16, #tpu.memory_space<vmem>>, vector<8x1x32xbf16>
    tpu.vector_store %arg7[%c0_13, %c15, %c64], %6 {strides = array<i32>} : memref<8x16x128xbf16, #tpu.memory_space<vmem>>, vector<8x1x32xbf16>,
    %c0_14 = arith.constant 0 : index
    %c1_15 = arith.constant 1 : index
    %c0_16 = arith.constant 0 : index
    %8 = vector.load %arg1[%c0_14, %c1_15, %c0_16] : memref<8x16x32xbf16, #tpu.memory_space<vmem>>, vector<8x15x32xbf16>
    %c0_17 = arith.constant 0 : index
    %c0_18 = arith.constant 0 : index
    %c64_19 = arith.constant 64 : index
    %9 = vector.load %arg7[%c0_17, %c0_18, %c64_19] : memref<8x16x128xbf16, #tpu.memory_space<vmem>>, vector<8x15x32xbf16>
    tpu.vector_store %arg7[%c0_17, %c0_18, %c64_19], %8 {strides = array<i32>} : memref<8x16x128xbf16, #tpu.memory_space<vmem>>, vector<8x15x32xbf16>,
    %cst_20 = arith.constant 0.000000e+00 : bf16
    %10 = vector.broadcast %cst_20 : bf16 to vector<8x16x32xbf16>
    %c0_21 = arith.constant 0 : index
    %c0_22 = arith.constant 0 : index
    %c96 = arith.constant 96 : index
    %11 = vector.load %arg7[%c0_21, %c0_22, %c96] : memref<8x16x128xbf16, #tpu.memory_space<vmem>>, vector<8x16x32xbf16>
    tpu.vector_store %arg7[%c0_21, %c0_22, %c96], %10 {strides = array<i32>} : memref<8x16x128xbf16, #tpu.memory_space<vmem>>, vector<8x16x32xbf16>,
    %c0_23 = arith.constant 0 : index
    %c0_24 = arith.constant 0 : index
    %c0_25 = arith.constant 0 : index
    %12 = vector.load %arg7[%c0_23, %c0_24, %c0_25] : memref<8x16x128xbf16, #tpu.memory_space<vmem>>, vector<8x16x128xbf16>
    %13 = vector.shape_cast %12 : vector<8x16x128xbf16> to vector<128x128xbf16>
    %c0_26 = arith.constant 0 : index
    %c0_27 = arith.constant 0 : index
    %14 = vector.load %arg2[%c0_26, %c0_27] : memref<128x256xbf16, #tpu.memory_space<vmem>>, vector<128x256xbf16>
    %cst_28 = arith.constant dense<0.000000e+00> : vector<128x256xf32>
    %15 = tpu.matmul %13, %14, %cst_28 {dimension_numbers = #tpu.dot_dimension_numbers<[1], [0], [0], [1], [0, 0, 1, 1], [], []>} : vector<128x128xbf16>, vector<128x256xbf16>, vector<128x256xf32> -> vector<128x256xf32>
    %c0_29 = arith.constant 0 : index
    %c0_30 = arith.constant 0 : index
    %16 = vector.load %arg3[%c0_29, %c0_30] : memref<1x256xf32, #tpu.memory_space<vmem>>, vector<1x256xf32>
    %17 = vector.broadcast %16 : vector<1x256xf32> to vector<128x256xf32>
    %18 = arith.addf %15, %17 : vector<128x256xf32>
    %cst_31 = arith.constant 0.000000e+00 : f32
    %19 = vector.broadcast %cst_31 : f32 to vector<128x256xf32>
    %20 = arith.maximumf %18, %19 : vector<128x256xf32>
    %21 = vector.shape_cast %20 : vector<128x256xf32> to vector<8x16x256xf32>
    %cst_32 = arith.constant 0.000000e+00 : f32
    %22 = vector.broadcast %cst_32 : f32 to vector<3x8x1xf32>
    %c0_33 = arith.constant 0 : index
    %c0_34 = arith.constant 0 : index
    %c0_35 = arith.constant 0 : index
    %23 = vector.load %arg8[%c0_33, %c0_34, %c0_35] : memref<3x8x18xf32, #tpu.memory_space<vmem>>, vector<3x8x1xf32>
    tpu.vector_store %arg8[%c0_33, %c0_34, %c0_35], %22 {strides = array<i32>} : memref<3x8x18xf32, #tpu.memory_space<vmem>>, vector<3x8x1xf32>,
    %cst_36 = arith.constant 0.000000e+00 : f32
    %24 = vector.broadcast %cst_36 : f32 to vector<3x8x1xf32>
    %c0_37 = arith.constant 0 : index
    %c0_38 = arith.constant 0 : index
    %c17 = arith.constant 17 : index
    %25 = vector.load %arg8[%c0_37, %c0_38, %c17] : memref<3x8x18xf32, #tpu.memory_space<vmem>>, vector<3x8x1xf32>
    tpu.vector_store %arg8[%c0_37, %c0_38, %c17], %24 {strides = array<i32>} : memref<3x8x18xf32, #tpu.memory_space<vmem>>, vector<3x8x1xf32>,
    %c0_39 = arith.constant 0 : index
    %c0_40 = arith.constant 0 : index
    %26 = vector.load %arg4[%c0_39, %c0_40] : memref<3x256xf32, #tpu.memory_space<vmem>>, vector<1x256xf32>
    %27 = vector.shape_cast %26 : vector<1x256xf32> to vector<1x1x256xf32>
    %28 = vector.broadcast %27 : vector<1x1x256xf32> to vector<8x16x256xf32>
    %29 = arith.mulf %21, %28 : vector<8x16x256xf32>
    %cst_41 = arith.constant dense<0.000000e+00> : vector<8x16xf32>
    %30 = vector.multi_reduction <add>, %29, %cst_41 [2] : vector<8x16x256xf32> to vector<8x16xf32>
    %c0_42 = arith.constant 0 : index
    %c0_43 = arith.constant 0 : index
    %c1_44 = arith.constant 1 : index
    %31 = vector.load %arg8[%c0_42, %c0_43, %c1_44] : memref<3x8x18xf32, #tpu.memory_space<vmem>>, vector<1x8x16xf32>
    %32 = vector.shape_cast %31 : vector<1x8x16xf32> to vector<8x16xf32>
    %33 = vector.shape_cast %30 : vector<8x16xf32> to vector<1x8x16xf32>
    tpu.vector_store %arg8[%c0_42, %c0_43, %c1_44], %33 {strides = array<i32>} : memref<3x8x18xf32, #tpu.memory_space<vmem>>, vector<1x8x16xf32>,
    %c1_45 = arith.constant 1 : index
    %c0_46 = arith.constant 0 : index
    %34 = vector.load %arg4[%c1_45, %c0_46] : memref<3x256xf32, #tpu.memory_space<vmem>>, vector<1x256xf32>
    %35 = vector.shape_cast %34 : vector<1x256xf32> to vector<1x1x256xf32>
    %36 = vector.broadcast %35 : vector<1x1x256xf32> to vector<8x16x256xf32>
    %37 = arith.mulf %21, %36 : vector<8x16x256xf32>
    %cst_47 = arith.constant dense<0.000000e+00> : vector<8x16xf32>
    %38 = vector.multi_reduction <add>, %37, %cst_47 [2] : vector<8x16x256xf32> to vector<8x16xf32>
    %c1_48 = arith.constant 1 : index
    %c0_49 = arith.constant 0 : index
    %c1_50 = arith.constant 1 : index
    %39 = vector.load %arg8[%c1_48, %c0_49, %c1_50] : memref<3x8x18xf32, #tpu.memory_space<vmem>>, vector<1x8x16xf32>
    %40 = vector.shape_cast %39 : vector<1x8x16xf32> to vector<8x16xf32>
    %41 = vector.shape_cast %38 : vector<8x16xf32> to vector<1x8x16xf32>
    tpu.vector_store %arg8[%c1_48, %c0_49, %c1_50], %41 {strides = array<i32>} : memref<3x8x18xf32, #tpu.memory_space<vmem>>, vector<1x8x16xf32>,
    %c2 = arith.constant 2 : index
    %c0_51 = arith.constant 0 : index
    %42 = vector.load %arg4[%c2, %c0_51] : memref<3x256xf32, #tpu.memory_space<vmem>>, vector<1x256xf32>
    %43 = vector.shape_cast %42 : vector<1x256xf32> to vector<1x1x256xf32>
    %44 = vector.broadcast %43 : vector<1x1x256xf32> to vector<8x16x256xf32>
    %45 = arith.mulf %21, %44 : vector<8x16x256xf32>
    %cst_52 = arith.constant dense<0.000000e+00> : vector<8x16xf32>
    %46 = vector.multi_reduction <add>, %45, %cst_52 [2] : vector<8x16x256xf32> to vector<8x16xf32>
    %c2_53 = arith.constant 2 : index
    %c0_54 = arith.constant 0 : index
    %c1_55 = arith.constant 1 : index
    %47 = vector.load %arg8[%c2_53, %c0_54, %c1_55] : memref<3x8x18xf32, #tpu.memory_space<vmem>>, vector<1x8x16xf32>
    %48 = vector.shape_cast %47 : vector<1x8x16xf32> to vector<8x16xf32>
    %49 = vector.shape_cast %46 : vector<8x16xf32> to vector<1x8x16xf32>
    tpu.vector_store %arg8[%c2_53, %c0_54, %c1_55], %49 {strides = array<i32>} : memref<3x8x18xf32, #tpu.memory_space<vmem>>, vector<1x8x16xf32>,
    %cst_56 = arith.constant 0.000000e+00 : f32
    %50 = vector.broadcast %cst_56 : f32 to vector<8x16xf32>
    %c0_57 = arith.constant 0 : index
    %c0_58 = arith.constant 0 : index
    %c0_59 = arith.constant 0 : index
    %51 = vector.load %arg8[%c0_57, %c0_58, %c0_59] : memref<3x8x18xf32, #tpu.memory_space<vmem>>, vector<1x8x16xf32>
    %52 = vector.shape_cast %51 : vector<1x8x16xf32> to vector<8x16xf32>
    %53 = arith.addf %50, %52 : vector<8x16xf32>
    %c1_60 = arith.constant 1 : index
    %c0_61 = arith.constant 0 : index
    %c1_62 = arith.constant 1 : index
    %54 = vector.load %arg8[%c1_60, %c0_61, %c1_62] : memref<3x8x18xf32, #tpu.memory_space<vmem>>, vector<1x8x16xf32>
    %55 = vector.shape_cast %54 : vector<1x8x16xf32> to vector<8x16xf32>
    %56 = arith.addf %53, %55 : vector<8x16xf32>
    %c2_63 = arith.constant 2 : index
    %c0_64 = arith.constant 0 : index
    %c2_65 = arith.constant 2 : index
    %57 = vector.load %arg8[%c2_63, %c0_64, %c2_65] : memref<3x8x18xf32, #tpu.memory_space<vmem>>, vector<1x8x16xf32>
    %58 = vector.shape_cast %57 : vector<1x8x16xf32> to vector<8x16xf32>
    %59 = arith.addf %56, %58 : vector<8x16xf32>
    %cst_66 = arith.constant dense<0xFF800000> : vector<8xf32>
    %60 = vector.multi_reduction <maximumf>, %59, %cst_66 [1] : vector<8x16xf32> to vector<8xf32>
    %61 = vector.shape_cast %60 : vector<8xf32> to vector<8x1xf32>
    %c0_67 = arith.constant 0 : index
    %c0_68 = arith.constant 0 : index
    %62 = vector.load %arg5[%c0_67, %c0_68] : memref<1x1xf32, #tpu.memory_space<vmem>>, vector<1x1xf32>
    %63 = vector.broadcast %62 : vector<1x1xf32> to vector<8x1xf32>
    %64 = arith.addf %61, %63 : vector<8x1xf32>
    %c0_69 = arith.constant 0 : index
    %c0_70 = arith.constant 0 : index
    %65 = vector.load %arg6[%c0_69, %c0_70] : memref<8x1xf32, #tpu.memory_space<vmem>>, vector<8x1xf32>
    tpu.vector_store %arg6[%c0_69, %c0_70], %64 {strides = array<i32>} : memref<8x1xf32, #tpu.memory_space<vmem>>, vector<8x1xf32>,
    return
  }
  func.func @transform_0(%arg0: i32) -> (i32, i32, i32) {
    %c0_i32 = arith.constant 0 : i32
    %c0_i32_0 = arith.constant 0 : i32
    %c0_i32_1 = arith.constant 0 : i32
    return %arg0, %c0_i32, %c0_i32_0 : i32, i32, i32
  }
  func.func @transform_1(%arg0: i32) -> (i32, i32) {
    %c0_i32 = arith.constant 0 : i32
    %c0_i32_0 = arith.constant 0 : i32
    %c0_i32_1 = arith.constant 0 : i32
    return %c0_i32, %c0_i32_0 : i32, i32
  }
  func.func @transform_2(%arg0: i32) -> (i32, i32) {
    %c0_i32 = arith.constant 0 : i32
    %c0_i32_0 = arith.constant 0 : i32
    %c0_i32_1 = arith.constant 0 : i32
    return %c0_i32, %c0_i32_0 : i32, i32
  }
  func.func @transform_3(%arg0: i32) -> (i32, i32) {
    %c0_i32 = arith.constant 0 : i32
    %c0_i32_0 = arith.constant 0 : i32
    %c0_i32_1 = arith.constant 0 : i32
    return %c0_i32, %c0_i32_0 : i32, i32
  }
  func.func @transform_4(%arg0: i32) -> (i32, i32) {
    %c0_i32 = arith.constant 0 : i32
    %c0_i32_0 = arith.constant 0 : i32
    %c0_i32_1 = arith.constant 0 : i32
    return %c0_i32, %c0_i32_0 : i32, i32
  }
  func.func @transform_5(%arg0: i32) -> (i32, i32) {
    %c0_i32 = arith.constant 0 : i32
    %c0_i32_0 = arith.constant 0 : i32
    return %arg0, %c0_i32 : i32, i32
  }
}

</mosaic_0001>

<llo_original>
// kernel: tpu_custom_call.1
$region0: #{tpu_custom_call.1}
  #allocation0 [shape = 'u32[]', space=smem, size = 0x4, offset = 0x4, fixed_abs, tag = 'smem constant byte address 0x4 - core index']
  #allocation1 [shape = 'u32[144,128]{1,0:T(1,128)}', space=vmem, size = 0x12000, scoped, tag = 'internal scratch']
  #allocation2 [shape = 'bf16[8,16,128]{2,1,0:T(16,128)(2,1)}', space=vmem, size = 0x8000, scoped, tag = 'scratch operand']
  #allocation3 [shape = 'f32[3,8,18]{2,1,0:T(8,128)}', space=vmem, size = 0x3000, scoped, tag = 'scratch operand']
  #allocation4 [shape = 'f32[1,1]{1,0:T(1,128)S(1)}', space=vmem, size = 0x200, scoped, tag = 'scoped memory for tpu_custom_call.1']
  %s0 = inlined_call_operand.hbm [shape: bf16[24,16,32], index: 0, kind: input, shape index: {}]
  %s1 = inlined_call_operand.hbm [shape: bf16[128,256], index: 1, kind: input, shape index: {}]
  %s2 = inlined_call_operand.vmem [shape: f32[1,256], index: 2, kind: input, shape index: {}]
  %s3 = inlined_call_operand.vmem [shape: f32[3,256], index: 3, kind: input, shape index: {}]
  %s4 = inlined_call_operand.<no memory space> [shape: f32[1,1], index: 4, kind: input, shape index: {}]
  %s5 = inlined_call_operand.vmem [shape: f32[24,1], index: 5, kind: output, shape index: {}]
  %s6 = sld [smem:[#allocation0]]
  $region61: #{tpu_custom_call.1} parent=0
    _
  %s8 = ssub.s32 1, %s6
  %s9 = scalar_select 0, %s8, %s6
  %v10 = vstv %s4
  %11 = vst [vmem:[#allocation4] sm:$0x1] %v10
  $region1: #{tpu_custom_call.1} parent=0
    #allocation5 [shape = 'u8[65536]{0}', space=vmem, size = 0x10000, scoped, tag = 'input window, operand 0']
    #allocation6 [shape = 's32[2]{0}', space=sflag, size = 0x8, scoped, tag = 'scoped memory for tpu_custom_call.1']
    #allocation7 [shape = 'u8[65536]{0}', space=vmem, size = 0x10000, scoped, tag = 'input window, operand 1, single buffered']
    #allocation8 [shape = 's32[1]{0}', space=sflag, size = 0x4, scoped, tag = 'scoped memory for tpu_custom_call.1']
    %12 = vsyncpa [#allocation6], 0
    %s13 = scalar_lea.sflag [#allocation6], 1
    %14 = vsyncpa %s13, 0
    %15 = vsyncpa [#allocation8], 0
    loop: start=0, step=1, limit=5
    $region2: #{tpu_custom_call.1} parent=1 // loop_pre_header
      _
    $region3: #{tpu_custom_call.1} parent=1 // loop_header
      %s17 = sphi 0, %s21
      %p18 = scmp.ge.s32.totalorder %s17, 5
      %s27 = sphi 0, %s29
      %s30 = sphi 0, %s27
      %s31 = sphi 0, %s30
      %s47 = sphi 0, %s31
      %s51 = sphi 0, %s51
      %s53 = sphi 0, %s51
      %s54 = sphi 0, %s53
      %s68 = sphi 0, %s54
      %s72 = sphi 0, %s72
      %s74 = sphi 0, %s72
      %s75 = sphi 0, %s74
      %s89 = sphi 0, %s75
      %s93 = sphi 0, %s93
      %s95 = sphi 0, %s93
      %s96 = sphi 0, %s95
      %s110 = sphi 0, %s96
      %s114 = sphi 0, %s114
      %s116 = sphi 0, %s114
      %s117 = sphi 0, %s116
      %s131 = sphi 0, %s117
      %s137 = sphi 0, %s139
      %s140 = sphi 0, %s137
      %s141 = sphi 0, %s140
      %s157 = sphi 0, %s141
    $region4: #{tpu_custom_call.1} parent=1 // loop_header_branch
      %20 = sbr.rel (%p18) target = $region8
    $region5: #{tpu_custom_call.1} parent=1 // loop_body
      %s22 = ssub.s32 %s17, 1
      %s23 = ssub.s32 %s17, 2
      %s24 = sadd.s32 %s17, 1
      %s25 = ssub.s32 %s17, %s24
      %p26 = scmp.eq.s32.totalorder %s25, 0
      %s28 = sadd.s32 %s27, 1
      %s29 = scalar_select %p26, %s27, %s28
      %p32 = pneg %p26
      %p33 = scmp.eq.s32.totalorder %s17, 2
      %p34 = por %p32, %p33
      %p35 = scmp.ne.s32.totalorder %s27, %s30
      %p36 = scmp.eq.s32.totalorder %s17, 0
      %p37 = por %p35, %p36
      %p38 = scmp.ne.s32.totalorder %s27, %s30
      %p39 = scmp.eq.s32.totalorder %s22, 2
      %p40 = por %p38, %p39
      %p41 = scmp.ne.s32.totalorder %s30, %s31
      %p42 = scmp.eq.s32.totalorder %s22, 0
      %p43 = por %p41, %p42
      %p44 = scmp.ne.s32.totalorder %s30, %s31
      %p45 = scmp.eq.s32.totalorder %s23, 2
      %p46 = por %p44, %p45
      %p48 = scmp.ne.s32.totalorder %s31, %s47
      %p49 = scmp.eq.s32.totalorder %s23, 0
      %p50 = por %p48, %p49
      %s52 = sadd.s32 %s51, 1
      %p55 = scmp.eq.s32.totalorder %s17, 2
      %p56 = scmp.ne.s32.totalorder %s51, %s53
      %p57 = scmp.eq.s32.totalorder %s17, 0
      %p58 = por %p56, %p57
      %p59 = scmp.ne.s32.totalorder %s51, %s53
      %p60 = scmp.eq.s32.totalorder %s22, 2
      %p61 = por %p59, %p60
      %p62 = scmp.ne.s32.totalorder %s53, %s54
      %p63 = scmp.eq.s32.totalorder %s22, 0
      %p64 = por %p62, %p63
      %p65 = scmp.ne.s32.totalorder %s53, %s54
      %p66 = scmp.eq.s32.totalorder %s23, 2
      %p67 = por %p65, %p66
      %p69 = scmp.ne.s32.totalorder %s54, %s68
      %p70 = scmp.eq.s32.totalorder %s23, 0
      %p71 = por %p69, %p70
      %s73 = sadd.s32 %s72, 1
      %p76 = scmp.eq.s32.totalorder %s17, 2
      %p77 = scmp.ne.s32.totalorder %s72, %s74
      %p78 = scmp.eq.s32.totalorder %s17, 0
      %p79 = por %p77, %p78
      %p80 = scmp.ne.s32.totalorder %s72, %s74
      %p81 = scmp.eq.s32.totalorder %s22, 2
      %p82 = por %p80, %p81
      %p83 = scmp.ne.s32.totalorder %s74, %s75
      %p84 = scmp.eq.s32.totalorder %s22, 0
      %p85 = por %p83, %p84
      %p86 = scmp.ne.s32.totalorder %s74, %s75
      %p87 = scmp.eq.s32.totalorder %s23, 2
      %p88 = por %p86, %p87
      %p90 = scmp.ne.s32.totalorder %s75, %s89
      %p91 = scmp.eq.s32.totalorder %s23, 0
      %p92 = por %p90, %p91
      %s94 = sadd.s32 %s93, 1
      %p97 = scmp.eq.s32.totalorder %s17, 2
      %p98 = scmp.ne.s32.totalorder %s93, %s95
      %p99 = scmp.eq.s32.totalorder %s17, 0
      %p100 = por %p98, %p99
      %p101 = scmp.ne.s32.totalorder %s93, %s95
      %p102 = scmp.eq.s32.totalorder %s22, 2
      %p103 = por %p101, %p102
      %p104 = scmp.ne.s32.totalorder %s95, %s96
      %p105 = scmp.eq.s32.totalorder %s22, 0
      %p106 = por %p104, %p105
      %p107 = scmp.ne.s32.totalorder %s95, %s96
      %p108 = scmp.eq.s32.totalorder %s23, 2
      %p109 = por %p107, %p108
      %p111 = scmp.ne.s32.totalorder %s96, %s110
      %p112 = scmp.eq.s32.totalorder %s23, 0
      %p113 = por %p111, %p112
      %s115 = sadd.s32 %s114, 1
      %p118 = scmp.eq.s32.totalorder %s17, 2
      %p119 = scmp.ne.s32.totalorder %s114, %s116
      %p120 = scmp.eq.s32.totalorder %s17, 0
      %p121 = por %p119, %p120
      %p122 = scmp.ne.s32.totalorder %s114, %s116
      %p123 = scmp.eq.s32.totalorder %s22, 2
      %p124 = por %p122, %p123
      %p125 = scmp.ne.s32.totalorder %s116, %s117
      %p126 = scmp.eq.s32.totalorder %s22, 0
      %p127 = por %p125, %p126
      %p128 = scmp.ne.s32.totalorder %s116, %s117
      %p129 = scmp.eq.s32.totalorder %s23, 2
      %p130 = por %p128, %p129
      %p132 = scmp.ne.s32.totalorder %s117, %s131
      %p133 = scmp.eq.s32.totalorder %s23, 0
      %p134 = por %p132, %p133
      %s135 = ssub.s32 %s17, %s24
      %p136 = scmp.eq.s32.totalorder %s135, 0
      %s138 = sadd.s32 %s137, 1
      %s139 = scalar_select %p136, %s137, %s138
      %p142 = pneg %p136
      %p143 = scmp.eq.s32.totalorder %s17, 2
      %p144 = por %p142, %p143
      %p145 = scmp.ne.s32.totalorder %s137, %s140
      %p146 = scmp.eq.s32.totalorder %s17, 0
      %p147 = por %p145, %p146
      %p148 = scmp.ne.s32.totalorder %s137, %s140
      %p149 = scmp.eq.s32.totalorder %s22, 2
      %p150 = por %p148, %p149
      %p151 = scmp.ne.s32.totalorder %s140, %s141
      %p152 = scmp.eq.s32.totalorder %s22, 0
      %p153 = por %p151, %p152
      %p154 = scmp.ne.s32.totalorder %s140, %s141
      %p155 = scmp.eq.s32.totalorder %s23, 2
      %p156 = por %p154, %p155
      %p158 = scmp.ne.s32.totalorder %s141, %s157
      %p159 = scmp.eq.s32.totalorder %s23, 0
      %p160 = por %p158, %p159
      %p161 = scmp.le.s32.totalorder 1, %s17
      %p162 = scmp.lt.s32.totalorder %s17, 4
      %p163 = pnand %p161, %p162
      %p164 = pneg %p163
      // Predicated region
      $region9: #{tpu_custom_call.1} parent=5 // pred_check
        _
      $region10: #{tpu_custom_call.1} parent=5 // pred_check_branch
        %166 = sbr.rel (%p163) target = $region12
      $region11: #{tpu_custom_call.1} parent=5 // pred_region
        %s167 = ssub.s32 %s17, 1
        // Predicated region
        $region13: #{tpu_custom_call.1} parent=11 // pred_check
          %p168 = pneg %p64
        $region14: #{tpu_custom_call.1} parent=11 // pred_check_branch
          %170 = sbr.rel (%p168) target = $region16
        $region15: #{tpu_custom_call.1} parent=11 // pred_region
          %s172 = ssub.s32 2048, 2048
          %173 = vsyncadd [#allocation8], %s172
          %s174 = sshll.u32 [#allocation7], 4
          %s175 = int_to_ptr.vmem [resolvable:$true] %s174
          %180 = dma.hbm_to_vmem [thread:$0]  %s1, 2048, %s175, [#allocation8], 128, 128, 8
        $region16: #{tpu_custom_call.1} parent=11 // pred_fallthru
          _
        // Predicated region
        $region17: #{tpu_custom_call.1} parent=11 // pred_check
          %p181 = pneg %p85
        $region18: #{tpu_custom_call.1} parent=11 // pred_check_branch
          %183 = sbr.rel (%p181) target = $region20
        $region19: #{tpu_custom_call.1} parent=11 // pred_region
          _
        $region20: #{tpu_custom_call.1} parent=11 // pred_fallthru
          _
        // Predicated region
        $region21: #{tpu_custom_call.1} parent=11 // pred_check
          %p184 = pneg %p106
        $region22: #{tpu_custom_call.1} parent=11 // pred_check_branch
          %186 = sbr.rel (%p184) target = $region24
        $region23: #{tpu_custom_call.1} parent=11 // pred_region
          _
        $region24: #{tpu_custom_call.1} parent=11 // pred_fallthru
          _
        // Predicated region
        $region25: #{tpu_custom_call.1} parent=11 // pred_check
          %p187 = pneg %p127
        $region26: #{tpu_custom_call.1} parent=11 // pred_check_branch
          %189 = sbr.rel (%p187) target = $region28
        $region27: #{tpu_custom_call.1} parent=11 // pred_region
          _
        $region28: #{tpu_custom_call.1} parent=11 // pred_fallthru
          _
      $region12: #{tpu_custom_call.1} parent=5 // pred_fallthru
        _
      %p190 = scmp.lt.s32.totalorder %s17, 3
      // Predicated region
      $region29: #{tpu_custom_call.1} parent=5 // pred_check
        %p191 = pneg %p190
      $region30: #{tpu_custom_call.1} parent=5 // pred_check_branch
        %193 = sbr.rel (%p191) target = $region32
      $region31: #{tpu_custom_call.1} parent=5 // pred_region
        // Predicated region
        $region33: #{tpu_custom_call.1} parent=31 // pred_check
          %p194 = pneg %p37
        $region34: #{tpu_custom_call.1} parent=31 // pred_check_branch
          %196 = sbr.rel (%p194) target = $region36
        $region35: #{tpu_custom_call.1} parent=31 // pred_region
          %s197 = sand.u32 %s27, 1
          %s198 = scalar_lea.sflag [#allocation6], %s197
          %s199 = sand.u32 %s27, 1
          %s200 = smul.addr %s199, 64
          %s201 = scalar_lea.vmem [#allocation5], %s200
          %s202 = smul.u32 8, %s17
          %s204 = ssub.s32 1024, 1024
          %205 = vsyncadd %s198, %s204
          %s206 = smul.addr %s202, 2
          %s207 = smul.addr %s206, 64
          %s208 = scalar_lea.hbm %s0, %s207
          %s209 = sshll.u32 %s201, 4
          %s210 = int_to_ptr.vmem [resolvable:$true] %s209
          %215 = dma.hbm_to_vmem [thread:$0]  %s208, 1024, %s210, %s198, 64, 64, 4
        $region36: #{tpu_custom_call.1} parent=31 // pred_fallthru
          _
      $region32: #{tpu_custom_call.1} parent=5 // pred_fallthru
        _
      %p216 = scmp.le.s32.totalorder 1, %s17
      %p217 = scmp.lt.s32.totalorder %s17, 4
      %p218 = pnand %p216, %p217
      %p219 = pneg %p218
      // Predicated region
      $region37: #{tpu_custom_call.1} parent=5 // pred_check
        _
      $region38: #{tpu_custom_call.1} parent=5 // pred_check_branch
        %221 = sbr.rel (%p218) target = $region40
      $region39: #{tpu_custom_call.1} parent=5 // pred_region
        %s222 = ssub.s32 %s17, 1
        %s223 = sand.u32 %s30, 1
        %s224 = scalar_lea.sflag [#allocation6], %s223
        %s225 = sand.u32 %s30, 1
        %s226 = smul.addr %s225, 64
        %s227 = scalar_lea.vmem [#allocation5], %s226
        // Predicated region
        $region41: #{tpu_custom_call.1} parent=39 // pred_check
          %p228 = pneg %p43
        $region42: #{tpu_custom_call.1} parent=39 // pred_check_branch
          %230 = sbr.rel (%p228) target = $region44
        $region43: #{tpu_custom_call.1} parent=39 // pred_region
          %231 = dma.done %s224, 1024
        $region44: #{tpu_custom_call.1} parent=39 // pred_fallthru
          _
        // Predicated region
        $region45: #{tpu_custom_call.1} parent=39 // pred_check
          %p232 = pneg %p64
        $region46: #{tpu_custom_call.1} parent=39 // pred_check_branch
          %234 = sbr.rel (%p232) target = $region48
        $region47: #{tpu_custom_call.1} parent=39 // pred_region
          %235 = dma.done [#allocation8], 2048
        $region48: #{tpu_custom_call.1} parent=39 // pred_fallthru
          _
        %s236 = sand.u32 %s30, 1
        %s237 = scalar_lea.sflag [#allocation6], %s236
        %s238 = sand.u32 %s30, 1
        %s239 = smul.addr %s238, 64
        %s240 = scalar_lea.vmem [#allocation5], %s239
        %p241 = pneg %p43
        %p242 = pneg %p40
        %p243 = pneg %p64
        %p244 = pneg %p61
        %p245 = pneg %p85
        %p246 = pneg %p82
        %p247 = pneg %p106
        %p248 = pneg %p103
        %p249 = pneg %p127
        %p250 = pneg %p124
        %p251 = pneg %p153
        %p252 = pneg %p150
        %p253 = scmp.lt.s32.totalorder %s22, 2
        %s254 = scalar_select %p253, %s22, 2
        %s255 = smul.addr %s254, 8
        %s256 = scalar_lea.vmem %s5, %s255
        %s257 = smul.u32 8, %s22
        %p258 = scmp.lt.s32.totalorder %s22, 2
        %s259 = scalar_select %p258, %s22, 2
        %s260 = smul.addr %s259, 8
        %s261 = scalar_lea.vmem %s5, %s260
        %vm263 = vcmask 253952
        %vm264 = vsmask.f32 256
        %vm265 = vmand %vm263, %vm264
        %v266 = vld [vmem:[#allocation2] sm:$0x1]
        %v267 = vsel %vm265, 0, %v266
        %268 = vst [vmem:[#allocation2] sm:$0x1] %v267
        %v269 = vld [vmem:[#allocation2 + $0x8] sm:$0x1]
        %v270 = vsel %vm265, 0, %v269
        %271 = vst [vmem:[#allocation2 + $0x8] sm:$0x1] %v270
        %v272 = vld [vmem:[#allocation2 + $0x10] sm:$0x1]
        %v273 = vsel %vm265, 0, %v272
        %274 = vst [vmem:[#allocation2 + $0x10] sm:$0x1] %v273
        %v275 = vld [vmem:[#allocation2 + $0x18] sm:$0x1]
        %v276 = vsel %vm265, 0, %v275
        %277 = vst [vmem:[#allocation2 + $0x18] sm:$0x1] %v276
        %v278 = vld [vmem:[#allocation2 + $0x20] sm:$0x1]
        %v279 = vsel %vm265, 0, %v278
        %280 = vst [vmem:[#allocation2 + $0x20] sm:$0x1] %v279
        %v281 = vld [vmem:[#allocation2 + $0x28] sm:$0x1]
        %v282 = vsel %vm265, 0, %v281
        %283 = vst [vmem:[#allocation2 + $0x28] sm:$0x1] %v282
        %v284 = vld [vmem:[#allocation2 + $0x30] sm:$0x1]
        %v285 = vsel %vm265, 0, %v284
        %286 = vst [vmem:[#allocation2 + $0x30] sm:$0x1] %v285
        %v287 = vld [vmem:[#allocation2 + $0x38] sm:$0x1]
        %v288 = vsel %vm265, 0, %v287
        %289 = vst [vmem:[#allocation2 + $0x38] sm:$0x1] %v288
        %v290 = vld [vmem:[%s227] sm:$0xf]
        %v291 = vld [vmem:[%s227 + $0x4] sm:$0xf]
        %v292 = vld [vmem:[%s227 + $0x8] sm:$0xf]
        %v293 = vld [vmem:[%s227 + $0xc] sm:$0xf]
        %v294 = vld [vmem:[%s227 + $0x10] sm:$0xf]
        %v295 = vld [vmem:[%s227 + $0x14] sm:$0xf]
        %v296 = vld [vmem:[%s227 + $0x18] sm:$0xf]
        %v297 = vld [vmem:[%s227 + $0x1c] sm:$0xf]
        %v298 = vld [vmem:[%s227 + $0x20] sm:$0xf]
        %v299 = vld [vmem:[%s227 + $0x24] sm:$0xf]
        %v300 = vld [vmem:[%s227 + $0x28] sm:$0xf]
        %v301 = vld [vmem:[%s227 + $0x2c] sm:$0xf]
        %v302 = vld [vmem:[%s227 + $0x30] sm:$0xf]
        %v303 = vld [vmem:[%s227 + $0x34] sm:$0xf]
        %v304 = vld [vmem:[%s227 + $0x38] sm:$0xf]
        %v305 = vld [vmem:[%s227 + $0x3c] sm:$0xf]
        %v322 = vunpack.c.l.b16 %v290
        %v323 = vunpack.c.l.b16 %v291
        %v324 = vunpack.c.l.b16 %v292
        %v325 = vunpack.c.l.b16 %v293
        %v326 = vunpack.c.l.b16 %v294
        %v327 = vunpack.c.l.b16 %v295
        %v328 = vunpack.c.l.b16 %v296
        %v329 = vunpack.c.l.b16 %v297
        %v330 = vunpack.c.l.b16 %v298
        %v331 = vunpack.c.l.b16 %v299
        %v332 = vunpack.c.l.b16 %v300
        %v333 = vunpack.c.l.b16 %v301
        %v334 = vunpack.c.l.b16 %v302
        %v335 = vunpack.c.l.b16 %v303
        %v336 = vunpack.c.l.b16 %v304
        %v337 = vunpack.c.l.b16 %v305
        %v338 = vpack.c.b16 %v323, %v322
        %v339 = vpack.c.b16 %v325, %v324
        %v340 = vpack.c.b16 %v327, %v326
        %v341 = vpack.c.b16 %v329, %v328
        %v342 = vpack.c.b16 %v331, %v330
        %v343 = vpack.c.b16 %v333, %v332
        %v344 = vpack.c.b16 %v335, %v334
        %v345 = vpack.c.b16 %v337, %v336
        %v347 = vshrl.u32 %v338, 16
        %v349 = vrot.slane %v347, 7
        %v350 = vshll.u32 %v338, 16
        %v352 = vor.u32 %v349, %v350
        %v354 = vshrl.u32 %v339, 16
        %v356 = vrot.slane %v354, 7
        %v357 = vshll.u32 %v339, 16
        %v359 = vor.u32 %v356, %v357
        %v361 = vshrl.u32 %v340, 16
        %v363 = vrot.slane %v361, 7
        %v364 = vshll.u32 %v340, 16
        %v366 = vor.u32 %v363, %v364
        %v368 = vshrl.u32 %v341, 16
        %v370 = vrot.slane %v368, 7
        %v371 = vshll.u32 %v341, 16
        %v373 = vor.u32 %v370, %v371
        %v375 = vshrl.u32 %v342, 16
        %v377 = vrot.slane %v375, 7
        %v378 = vshll.u32 %v342, 16
        %v380 = vor.u32 %v377, %v378
        %v382 = vshrl.u32 %v343, 16
        %v384 = vrot.slane %v382, 7
        %v385 = vshll.u32 %v343, 16
        %v387 = vor.u32 %v384, %v385
        %v389 = vshrl.u32 %v344, 16
        %v391 = vrot.slane %v389, 7
        %v392 = vshll.u32 %v344, 16
        %v394 = vor.u32 %v391, %v392
        %v396 = vshrl.u32 %v345, 16
        %v398 = vrot.slane %v396, 7
        %v399 = vshll.u32 %v345, 16
        %v401 = vor.u32 %v398, %v399
        %vm410 = vcmask 261120
        %vm411 = vsmask.f32 7938
        %vm412 = vmand %vm410, %vm411
        %v413 = vld [vmem:[#allocation2] sm:$0xff]
        %v414 = vsel %vm412, %v352, %v413
        %415 = vst [vmem:[#allocation2] sm:$0xff] %v414
        %v416 = vld [vmem:[#allocation2 + $0x8] sm:$0xff]
        %v417 = vsel %vm412, %v359, %v416
        %418 = vst [vmem:[#allocation2 + $0x8] sm:$0xff] %v417
        %v419 = vld [vmem:[#allocation2 + $0x10] sm:$0xff]
        %v420 = vsel %vm412, %v366, %v419
        %421 = vst [vmem:[#allocation2 + $0x10] sm:$0xff] %v420
        %v422 = vld [vmem:[#allocation2 + $0x18] sm:$0xff]
        %v423 = vsel %vm412, %v373, %v422
        %424 = vst [vmem:[#allocation2 + $0x18] sm:$0xff] %v423
        %v425 = vld [vmem:[#allocation2 + $0x20] sm:$0xff]
        %v426 = vsel %vm412, %v380, %v425
        %427 = vst [vmem:[#allocation2 + $0x20] sm:$0xff] %v426
        %v428 = vld [vmem:[#allocation2 + $0x28] sm:$0xff]
        %v429 = vsel %vm412, %v387, %v428
        %430 = vst [vmem:[#allocation2 + $0x28] sm:$0xff] %v429
        %v431 = vld [vmem:[#allocation2 + $0x30] sm:$0xff]
        %v432 = vsel %vm412, %v394, %v431
        %433 = vst [vmem:[#allocation2 + $0x30] sm:$0xff] %v432
        %v434 = vld [vmem:[#allocation2 + $0x38] sm:$0xff]
        %v435 = vsel %vm412, %v401, %v434
        %436 = vst [vmem:[#allocation2 + $0x38] sm:$0xff] %v435
        %v437 = vld [vmem:[%s227] sm:$0xf]
        %v438 = vld [vmem:[%s227 + $0x4] sm:$0xf]
        %v439 = vld [vmem:[%s227 + $0x8] sm:$0xf]
        %v440 = vld [vmem:[%s227 + $0xc] sm:$0xf]
        %v441 = vld [vmem:[%s227 + $0x10] sm:$0xf]
        %v442 = vld [vmem:[%s227 + $0x14] sm:$0xf]
        %v443 = vld [vmem:[%s227 + $0x18] sm:$0xf]
        %v444 = vld [vmem:[%s227 + $0x1c] sm:$0xf]
        %v445 = vld [vmem:[%s227 + $0x20] sm:$0xf]
        %v446 = vld [vmem:[%s227 + $0x24] sm:$0xf]
        %v447 = vld [vmem:[%s227 + $0x28] sm:$0xf]
        %v448 = vld [vmem:[%s227 + $0x2c] sm:$0xf]
        %v449 = vld [vmem:[%s227 + $0x30] sm:$0xf]
        %v450 = vld [vmem:[%s227 + $0x34] sm:$0xf]
        %v451 = vld [vmem:[%s227 + $0x38] sm:$0xf]
        %v452 = vld [vmem:[%s227 + $0x3c] sm:$0xf]
        %v469 = vunpack.c.l.b16 %v437
        %v470 = vunpack.c.l.b16 %v438
        %v471 = vunpack.c.l.b16 %v439
        %v472 = vunpack.c.l.b16 %v440
        %v473 = vunpack.c.l.b16 %v441
        %v474 = vunpack.c.l.b16 %v442
        %v475 = vunpack.c.l.b16 %v443
        %v476 = vunpack.c.l.b16 %v444
        %v477 = vunpack.c.l.b16 %v445
        %v478 = vunpack.c.l.b16 %v446
        %v479 = vunpack.c.l.b16 %v447
        %v480 = vunpack.c.l.b16 %v448
        %v481 = vunpack.c.l.b16 %v449
        %v482 = vunpack.c.l.b16 %v450
        %v483 = vunpack.c.l.b16 %v451
        %v484 = vunpack.c.l.b16 %v452
        %v485 = vpack.c.b16 %v470, %v469
        %v486 = vpack.c.b16 %v472, %v471
        %v487 = vpack.c.b16 %v474, %v473
        %v488 = vpack.c.b16 %v476, %v475
        %v489 = vpack.c.b16 %v478, %v477
        %v490 = vpack.c.b16 %v480, %v479
        %v491 = vpack.c.b16 %v482, %v481
        %v492 = vpack.c.b16 %v484, %v483
        %493 = vrot.lane.b32.xlu0 %v485, 32
        %v494 = vpop.permute.xlu0 %493
        %495 = vrot.lane.b32.xlu0 %v486, 32
        %v496 = vpop.permute.xlu0 %495
        %497 = vrot.lane.b32.xlu0 %v487, 32
        %v498 = vpop.permute.xlu0 %497
        %499 = vrot.lane.b32.xlu0 %v488, 32
        %v500 = vpop.permute.xlu0 %499
        %501 = vrot.lane.b32.xlu0 %v489, 32
        %v502 = vpop.permute.xlu0 %501
        %503 = vrot.lane.b32.xlu0 %v490, 32
        %v504 = vpop.permute.xlu0 %503
        %505 = vrot.lane.b32.xlu0 %v491, 32
        %v506 = vpop.permute.xlu0 %505
        %507 = vrot.lane.b32.xlu0 %v492, 32
        %v508 = vpop.permute.xlu0 %507
        %vm517 = vcmask 523520
        %518 = vst.msk [vmem:[#allocation2] sm:$0xff] %vm517, %v494
        %519 = vst.msk [vmem:[#allocation2 + $0x8] sm:$0xff] %vm517, %v496
        %520 = vst.msk [vmem:[#allocation2 + $0x10] sm:$0xff] %vm517, %v498
        %521 = vst.msk [vmem:[#allocation2 + $0x18] sm:$0xff] %vm517, %v500
        %522 = vst.msk [vmem:[#allocation2 + $0x20] sm:$0xff] %vm517, %v502
        %523 = vst.msk [vmem:[#allocation2 + $0x28] sm:$0xff] %vm517, %v504
        %524 = vst.msk [vmem:[#allocation2 + $0x30] sm:$0xff] %vm517, %v506
        %525 = vst.msk [vmem:[#allocation2 + $0x38] sm:$0xff] %vm517, %v508
        %vm526 = vcmask 785927
        %vm527 = vsmask.f32 7966
        %vm528 = vmand %vm526, %vm527
        %v529 = vld [vmem:[#allocation2] sm:$0x80]
        %v530 = vsel %vm528, 0, %v529
        %531 = vst [vmem:[#allocation2] sm:$0x80] %v530
        %v532 = vld [vmem:[#allocation2 + $0x8] sm:$0x80]
        %v533 = vsel %vm528, 0, %v532
        %534 = vst [vmem:[#allocation2 + $0x8] sm:$0x80] %v533
        %v535 = vld [vmem:[#allocation2 + $0x10] sm:$0x80]
        %v536 = vsel %vm528, 0, %v535
        %537 = vst [vmem:[#allocation2 + $0x10] sm:$0x80] %v536
        %v538 = vld [vmem:[#allocation2 + $0x18] sm:$0x80]
        %v539 = vsel %vm528, 0, %v538
        %540 = vst [vmem:[#allocation2 + $0x18] sm:$0x80] %v539
        %v541 = vld [vmem:[#allocation2 + $0x20] sm:$0x80]
        %v542 = vsel %vm528, 0, %v541
        %543 = vst [vmem:[#allocation2 + $0x20] sm:$0x80] %v542
        %v544 = vld [vmem:[#allocation2 + $0x28] sm:$0x80]
        %v545 = vsel %vm528, 0, %v544
        %546 = vst [vmem:[#allocation2 + $0x28] sm:$0x80] %v545
        %v547 = vld [vmem:[#allocation2 + $0x30] sm:$0x80]
        %v548 = vsel %vm528, 0, %v547
        %549 = vst [vmem:[#allocation2 + $0x30] sm:$0x80] %v548
        %v550 = vld [vmem:[#allocation2 + $0x38] sm:$0x80]
        %v551 = vsel %vm528, 0, %v550
        %552 = vst [vmem:[#allocation2 + $0x38] sm:$0x80] %v551
        %v553 = vld [vmem:[%s227] sm:$0xf]
        %v554 = vld [vmem:[%s227 + $0x4] sm:$0xf]
        %v555 = vld [vmem:[%s227 + $0x8] sm:$0xf]
        %v556 = vld [vmem:[%s227 + $0xc] sm:$0xf]
        %v557 = vld [vmem:[%s227 + $0x10] sm:$0xf]
        %v558 = vld [vmem:[%s227 + $0x14] sm:$0xf]
        %v559 = vld [vmem:[%s227 + $0x18] sm:$0xf]
        %v560 = vld [vmem:[%s227 + $0x1c] sm:$0xf]
        %v561 = vld [vmem:[%s227 + $0x20] sm:$0xf]
        %v562 = vld [vmem:[%s227 + $0x24] sm:$0xf]
        %v563 = vld [vmem:[%s227 + $0x28] sm:$0xf]
        %v564 = vld [vmem:[%s227 + $0x2c] sm:$0xf]
        %v565 = vld [vmem:[%s227 + $0x30] sm:$0xf]
        %v566 = vld [vmem:[%s227 + $0x34] sm:$0xf]
        %v567 = vld [vmem:[%s227 + $0x38] sm:$0xf]
        %v568 = vld [vmem:[%s227 + $0x3c] sm:$0xf]
        %v585 = vunpack.c.l.b16 %v553
        %v586 = vunpack.c.l.b16 %v554
        %v587 = vunpack.c.l.b16 %v555
        %v588 = vunpack.c.l.b16 %v556
        %v589 = vunpack.c.l.b16 %v557
        %v590 = vunpack.c.l.b16 %v558
        %v591 = vunpack.c.l.b16 %v559
        %v592 = vunpack.c.l.b16 %v560
        %v593 = vunpack.c.l.b16 %v561
        %v594 = vunpack.c.l.b16 %v562
        %v595 = vunpack.c.l.b16 %v563
        %v596 = vunpack.c.l.b16 %v564
        %v597 = vunpack.c.l.b16 %v565
        %v598 = vunpack.c.l.b16 %v566
        %v599 = vunpack.c.l.b16 %v567
        %v600 = vunpack.c.l.b16 %v568
        %v601 = vpack.c.b16 %v586, %v585
        %v602 = vpack.c.b16 %v588, %v587
        %v603 = vpack.c.b16 %v590, %v589
        %v604 = vpack.c.b16 %v592, %v591
        %v605 = vpack.c.b16 %v594, %v593
        %v606 = vpack.c.b16 %v596, %v595
        %v607 = vpack.c.b16 %v598, %v597
        %v608 = vpack.c.b16 %v600, %v599
        %v610 = vshrl.u32 %v601, 16
        %v612 = vshll.u32 %v601, 16
        %v614 = vrot.slane %v612, 1
        %v615 = vor.u32 %v610, %v614
        %v617 = vshrl.u32 %v602, 16
        %v619 = vshll.u32 %v602, 16
        %v621 = vrot.slane %v619, 1
        %v622 = vor.u32 %v617, %v621
        %v624 = vshrl.u32 %v603, 16
        %v626 = vshll.u32 %v603, 16
        %v628 = vrot.slane %v626, 1
        %v629 = vor.u32 %v624, %v628
        %v631 = vshrl.u32 %v604, 16
        %v633 = vshll.u32 %v604, 16
        %v635 = vrot.slane %v633, 1
        %v636 = vor.u32 %v631, %v635
        %v638 = vshrl.u32 %v605, 16
        %v640 = vshll.u32 %v605, 16
        %v642 = vrot.slane %v640, 1
        %v643 = vor.u32 %v638, %v642
        %v645 = vshrl.u32 %v606, 16
        %v647 = vshll.u32 %v606, 16
        %v649 = vrot.slane %v647, 1
        %v650 = vor.u32 %v645, %v649
        %v652 = vshrl.u32 %v607, 16
        %v654 = vshll.u32 %v607, 16
        %v656 = vrot.slane %v654, 1
        %v657 = vor.u32 %v652, %v656
        %v659 = vshrl.u32 %v608, 16
        %v661 = vshll.u32 %v608, 16
        %v663 = vrot.slane %v661, 1
        %v664 = vor.u32 %v659, %v663
        %665 = vrot.lane.b32.xlu0 %v615, 64
        %v666 = vpop.permute.xlu0 %665
        %667 = vrot.lane.b32.xlu0 %v622, 64
        %v668 = vpop.permute.xlu0 %667
        %669 = vrot.lane.b32.xlu0 %v629, 64
        %v670 = vpop.permute.xlu0 %669
        %671 = vrot.lane.b32.xlu0 %v636, 64
        %v672 = vpop.permute.xlu0 %671
        %673 = vrot.lane.b32.xlu0 %v643, 64
        %v674 = vpop.permute.xlu0 %673
        %675 = vrot.lane.b32.xlu0 %v650, 64
        %v676 = vpop.permute.xlu0 %675
        %677 = vrot.lane.b32.xlu0 %v657, 64
        %v678 = vpop.permute.xlu0 %677
        %679 = vrot.lane.b32.xlu0 %v664, 64
        %v680 = vpop.permute.xlu0 %679
        %vm689 = vcmask 785920
        %vm690 = vsmask.f32 7424
        %vm691 = vmand %vm689, %vm690
        %v692 = vld [vmem:[#allocation2] sm:$0xff]
        %v693 = vsel %vm691, %v666, %v692
        %694 = vst [vmem:[#allocation2] sm:$0xff] %v693
        %v695 = vld [vmem:[#allocation2 + $0x8] sm:$0xff]
        %v696 = vsel %vm691, %v668, %v695
        %697 = vst [vmem:[#allocation2 + $0x8] sm:$0xff] %v696
        %v698 = vld [vmem:[#allocation2 + $0x10] sm:$0xff]
        %v699 = vsel %vm691, %v670, %v698
        %700 = vst [vmem:[#allocation2 + $0x10] sm:$0xff] %v699
        %v701 = vld [vmem:[#allocation2 + $0x18] sm:$0xff]
        %v702 = vsel %vm691, %v672, %v701
        %703 = vst [vmem:[#allocation2 + $0x18] sm:$0xff] %v702
        %v704 = vld [vmem:[#allocation2 + $0x20] sm:$0xff]
        %v705 = vsel %vm691, %v674, %v704
        %706 = vst [vmem:[#allocation2 + $0x20] sm:$0xff] %v705
        %v707 = vld [vmem:[#allocation2 + $0x28] sm:$0xff]
        %v708 = vsel %vm691, %v676, %v707
        %709 = vst [vmem:[#allocation2 + $0x28] sm:$0xff] %v708
        %v710 = vld [vmem:[#allocation2 + $0x30] sm:$0xff]
        %v711 = vsel %vm691, %v678, %v710
        %712 = vst [vmem:[#allocation2 + $0x30] sm:$0xff] %v711
        %v713 = vld [vmem:[#allocation2 + $0x38] sm:$0xff]
        %v714 = vsel %vm691, %v680, %v713
        %715 = vst [vmem:[#allocation2 + $0x38] sm:$0xff] %v714
        %vm716 = vcmask 1048320
        %717 = vst.msk [vmem:[#allocation2] sm:$0xff] %vm716, 0
        %718 = vst.msk [vmem:[#allocation2 + $0x8] sm:$0xff] %vm716, 0
        %719 = vst.msk [vmem:[#allocation2 + $0x10] sm:$0xff] %vm716, 0
        %720 = vst.msk [vmem:[#allocation2 + $0x18] sm:$0xff] %vm716, 0
        %721 = vst.msk [vmem:[#allocation2 + $0x20] sm:$0xff] %vm716, 0
        %722 = vst.msk [vmem:[#allocation2 + $0x28] sm:$0xff] %vm716, 0
        %723 = vst.msk [vmem:[#allocation2 + $0x30] sm:$0xff] %vm716, 0
        %724 = vst.msk [vmem:[#allocation2 + $0x38] sm:$0xff] %vm716, 0
        %v725 = vld [vmem:[#allocation2] sm:$0xff]
        %v726 = vld [vmem:[#allocation2 + $0x8] sm:$0xff]
        %v727 = vld [vmem:[#allocation2 + $0x10] sm:$0xff]
        %v728 = vld [vmem:[#allocation2 + $0x18] sm:$0xff]
        %v729 = vld [vmem:[#allocation2 + $0x20] sm:$0xff]
        %v730 = vld [vmem:[#allocation2 + $0x28] sm:$0xff]
        %v731 = vld [vmem:[#allocation2 + $0x30] sm:$0xff]
        %v732 = vld [vmem:[#allocation2 + $0x38] sm:$0xff]
        %v733 = vld [vmem:[#allocation7] sm:$0xff]
        %v734 = vld [vmem:[#allocation7 + $0x8] sm:$0xff]
        %v735 = vld [vmem:[#allocation7 + $0x10] sm:$0xff]
        %v736 = vld [vmem:[#allocation7 + $0x18] sm:$0xff]
        %v737 = vld [vmem:[#allocation7 + $0x20] sm:$0xff]
        %v738 = vld [vmem:[#allocation7 + $0x28] sm:$0xff]
        %v739 = vld [vmem:[#allocation7 + $0x30] sm:$0xff]
        %v740 = vld [vmem:[#allocation7 + $0x38] sm:$0xff]
        %v741 = vld [vmem:[#allocation7 + $0x40] sm:$0xff]
        %v742 = vld [vmem:[#allocation7 + $0x48] sm:$0xff]
        %v743 = vld [vmem:[#allocation7 + $0x50] sm:$0xff]
        %v744 = vld [vmem:[#allocation7 + $0x58] sm:$0xff]
        %v745 = vld [vmem:[#allocation7 + $0x60] sm:$0xff]
        %v746 = vld [vmem:[#allocation7 + $0x68] sm:$0xff]
        %v747 = vld [vmem:[#allocation7 + $0x70] sm:$0xff]
        %v748 = vld [vmem:[#allocation7 + $0x78] sm:$0xff]
        %v749 = vld [vmem:[%s2] sm:$0x3]
        %v751 = vlaneseq
        %v752 = vshrl.u32 %v751, 7
        %v753 = vsub.s32 0, %v752
        %v754 = vrot.slane %v749, %v753
        %v755 = vlaneseq
        %v756 = vshrl.u32 %v755, 7
        %v757 = vsub.s32 1, %v756
        %v758 = vrot.slane %v749, %v757
        %v777 = vunpack.c.l.b16 %v733
        %v778 = vunpack.c.h.b16 %v733
        %v779 = vunpack.c.l.b16 %v734
        %v780 = vunpack.c.h.b16 %v734
        %v781 = vunpack.c.l.b16 %v735
        %v782 = vunpack.c.h.b16 %v735
        %v783 = vunpack.c.l.b16 %v736
        %v784 = vunpack.c.h.b16 %v736
        %v785 = vunpack.c.l.b16 %v737
        %v786 = vunpack.c.h.b16 %v737
        %v787 = vunpack.c.l.b16 %v738
        %v788 = vunpack.c.h.b16 %v738
        %v789 = vunpack.c.l.b16 %v739
        %v790 = vunpack.c.h.b16 %v739
        %v791 = vunpack.c.l.b16 %v740
        %v792 = vunpack.c.h.b16 %v740
        %v793 = vunpack.c.l.b16 %v741
        %v794 = vunpack.c.h.b16 %v741
        %v795 = vunpack.c.l.b16 %v742
        %v796 = vunpack.c.h.b16 %v742
        %v797 = vunpack.c.l.b16 %v743
        %v798 = vunpack.c.h.b16 %v743
        %v799 = vunpack.c.l.b16 %v744
        %v800 = vunpack.c.h.b16 %v744
        %v801 = vunpack.c.l.b16 %v745
        %v802 = vunpack.c.h.b16 %v745
        %v803 = vunpack.c.l.b16 %v746
        %v804 = vunpack.c.h.b16 %v746
        %v805 = vunpack.c.l.b16 %v747
        %v806 = vunpack.c.h.b16 %v747
        %v807 = vunpack.c.l.b16 %v748
        %v808 = vunpack.c.h.b16 %v748
        %v809 = vpack.c.b16 %v779, %v777
        %v810 = vpack.c.b16 %v780, %v778
        %v811 = vpack.c.b16 %v783, %v781
        %v812 = vpack.c.b16 %v784, %v782
        %v813 = vpack.c.b16 %v787, %v785
        %v814 = vpack.c.b16 %v788, %v786
        %v815 = vpack.c.b16 %v791, %v789
        %v816 = vpack.c.b16 %v792, %v790
        %v817 = vpack.c.b16 %v795, %v793
        %v818 = vpack.c.b16 %v796, %v794
        %v819 = vpack.c.b16 %v799, %v797
        %v820 = vpack.c.b16 %v800, %v798
        %v821 = vpack.c.b16 %v803, %v801
        %v822 = vpack.c.b16 %v804, %v802
        %v823 = vpack.c.b16 %v807, %v805
        %v824 = vpack.c.b16 %v808, %v806
        %841 = vmatprep.subr.bf16.mxu0 %v810
        %842 = vmatpush1.bf16.msra.mxu0 %v809
        %843 = vmatprep.subr.bf16.mxu0 %v812
        %844 = vmatpush1.bf16.msra.mxu0 %v811
        %845 = vmatprep.subr.bf16.mxu0 %v814
        %846 = vmatpush1.bf16.msra.mxu0 %v813
        %847 = vmatprep.subr.bf16.mxu0 %v816
        %848 = vmatpush1.bf16.msra.mxu0 %v815
        %849 = vmatprep.subr.bf16.mxu0 %v818
        %850 = vmatpush1.bf16.msra.mxu0 %v817
        %851 = vmatprep.subr.bf16.mxu0 %v820
        %852 = vmatpush1.bf16.msra.mxu0 %v819
        %853 = vmatprep.subr.bf16.mxu0 %v822
        %854 = vmatpush1.bf16.msra.mxu0 %v821
        %855 = vmatprep.subr.bf16.mxu0 %v824
        %856 = vmatpush1.bf16.msra.mxu0 %v823
        %857 = vmatprep.subr.bf16.mxu0 0
        %858 = vmatpush1.bf16.msra.mxu0 0
        %859 = vmatprep.subr.bf16.mxu0 0
        %860 = vmatpush1.bf16.msra.mxu0 0
        %861 = vmatprep.subr.bf16.mxu0 0
        %862 = vmatpush1.bf16.msra.mxu0 0
        %863 = vmatprep.subr.bf16.mxu0 0
        %864 = vmatpush1.bf16.msra.mxu0 0
        %865 = vmatprep.subr.bf16.mxu0 0
        %866 = vmatpush1.bf16.msra.mxu0 0
        %867 = vmatprep.subr.bf16.mxu0 0
        %868 = vmatpush1.bf16.msra.mxu0 0
        %869 = vmatprep.subr.bf16.mxu0 0
        %870 = vmatpush1.bf16.msra.mxu0 0
        %871 = vmatprep.subr.bf16.mxu0 0
        %872 = vmatpush1.bf16.msra.mxu0 0
        %873 = vmatprep.mubr.bf16.mxu0 0
        %874 = vmatmul.mubr.bf16.gmra.mrb[0].mxu0 %v725
        %v875 = vpop.f32.mrb[0].mxu0
        %v876 = vadd.f32 %v754, %v875
        %v877 = vpop.f32.mrb[0].mxu0
        %v878 = vadd.f32 %v758, %v877
        %v879 = vpop.f32.mrb[0].mxu0
        %v880 = vadd.f32 %v754, %v879
        %v881 = vpop.f32.mrb[0].mxu0
        %v882 = vadd.f32 %v758, %v881
        %883 = vmatprep.mubr.bf16.mxu0 0
        %884 = vmatmul.mubr.bf16.gmra.mrb[0].mxu0 %v726
        %v885 = vpop.f32.mrb[0].mxu0
        %v886 = vadd.f32 %v754, %v885
        %v887 = vpop.f32.mrb[0].mxu0
        %v888 = vadd.f32 %v758, %v887
        %v889 = vpop.f32.mrb[0].mxu0
        %v890 = vadd.f32 %v754, %v889
        %v891 = vpop.f32.mrb[0].mxu0
        %v892 = vadd.f32 %v758, %v891
        %893 = vmatprep.mubr.bf16.mxu0 0
        %894 = vmatmul.mubr.bf16.gmra.mrb[0].mxu0 %v727
        %v895 = vpop.f32.mrb[0].mxu0
        %v896 = vadd.f32 %v754, %v895
        %v897 = vpop.f32.mrb[0].mxu0
        %v898 = vadd.f32 %v758, %v897
        %v899 = vpop.f32.mrb[0].mxu0
        %v900 = vadd.f32 %v754, %v899
        %v901 = vpop.f32.mrb[0].mxu0
        %v902 = vadd.f32 %v758, %v901
        %903 = vmatprep.mubr.bf16.mxu0 0
        %904 = vmatmul.mubr.bf16.gmra.mrb[0].mxu0 %v728
        %v905 = vpop.f32.mrb[0].mxu0
        %v906 = vadd.f32 %v754, %v905
        %v907 = vpop.f32.mrb[0].mxu0
        %v908 = vadd.f32 %v758, %v907
        %v909 = vpop.f32.mrb[0].mxu0
        %v910 = vadd.f32 %v754, %v909
        %v911 = vpop.f32.mrb[0].mxu0
        %v912 = vadd.f32 %v758, %v911
        %913 = vmatprep.mubr.bf16.mxu0 0
        %914 = vmatmul.mubr.bf16.gmra.mrb[0].mxu0 %v729
        %v915 = vpop.f32.mrb[0].mxu0
        %v916 = vadd.f32 %v754, %v915
        %v917 = vpop.f32.mrb[0].mxu0
        %v918 = vadd.f32 %v758, %v917
        %v919 = vpop.f32.mrb[0].mxu0
        %v920 = vadd.f32 %v754, %v919
        %v921 = vpop.f32.mrb[0].mxu0
        %v922 = vadd.f32 %v758, %v921
        %923 = vmatprep.mubr.bf16.mxu0 0
        %924 = vmatmul.mubr.bf16.gmra.mrb[0].mxu0 %v730
        %v925 = vpop.f32.mrb[0].mxu0
        %v926 = vadd.f32 %v754, %v925
        %v927 = vpop.f32.mrb[0].mxu0
        %v928 = vadd.f32 %v758, %v927
        %v929 = vpop.f32.mrb[0].mxu0
        %v930 = vadd.f32 %v754, %v929
        %v931 = vpop.f32.mrb[0].mxu0
        %v932 = vadd.f32 %v758, %v931
        %933 = vmatprep.mubr.bf16.mxu0 0
        %934 = vmatmul.mubr.bf16.gmra.mrb[0].mxu0 %v731
        %v935 = vpop.f32.mrb[0].mxu0
        %v936 = vadd.f32 %v754, %v935
        %v937 = vpop.f32.mrb[0].mxu0
        %v938 = vadd.f32 %v758, %v937
        %v939 = vpop.f32.mrb[0].mxu0
        %v940 = vadd.f32 %v754, %v939
        %v941 = vpop.f32.mrb[0].mxu0
        %v942 = vadd.f32 %v758, %v941
        %943 = vmatprep.mubr.bf16.mxu0 0
        %944 = vmatmul.mubr.bf16.gmra.mrb[0].mxu0 %v732
        %v945 = vpop.f32.mrb[0].mxu0
        %v946 = vadd.f32 %v754, %v945
        %v947 = vpop.f32.mrb[0].mxu0
        %v948 = vadd.f32 %v758, %v947
        %v949 = vpop.f32.mrb[0].mxu0
        %v950 = vadd.f32 %v754, %v949
        %v951 = vpop.f32.mrb[0].mxu0
        %v952 = vadd.f32 %v758, %v951
        %953 = vdwg.mxu0
        %v954 = vmax.f32 %v876, 0.0
        %v955 = vmax.f32 %v878, 0.0
        %v956 = vmax.f32 %v880, 0.0
        %v957 = vmax.f32 %v882, 0.0
        %v958 = vmax.f32 %v886, 0.0
        %v959 = vmax.f32 %v888, 0.0
        %v960 = vmax.f32 %v890, 0.0
        %v961 = vmax.f32 %v892, 0.0
        %v962 = vmax.f32 %v896, 0.0
        %v963 = vmax.f32 %v898, 0.0
        %v964 = vmax.f32 %v900, 0.0
        %v965 = vmax.f32 %v902, 0.0
        %v966 = vmax.f32 %v906, 0.0
        %v967 = vmax.f32 %v908, 0.0
        %v968 = vmax.f32 %v910, 0.0
        %v969 = vmax.f32 %v912, 0.0
        %v970 = vmax.f32 %v916, 0.0
        %v971 = vmax.f32 %v918, 0.0
        %v972 = vmax.f32 %v920, 0.0
        %v973 = vmax.f32 %v922, 0.0
        %v974 = vmax.f32 %v926, 0.0
        %v975 = vmax.f32 %v928, 0.0
        %v976 = vmax.f32 %v930, 0.0
        %v977 = vmax.f32 %v932, 0.0
        %v978 = vmax.f32 %v936, 0.0
        %v979 = vmax.f32 %v938, 0.0
        %v980 = vmax.f32 %v940, 0.0
        %v981 = vmax.f32 %v942, 0.0
        %v982 = vmax.f32 %v946, 0.0
        %v983 = vmax.f32 %v948, 0.0
        %v984 = vmax.f32 %v950, 0.0
        %v985 = vmax.f32 %v952, 0.0
        %vm986 = vcmask 7168
        %987 = vst.msk [vmem:[#allocation3] sm:$0xff] %vm986, 0.0
        %988 = vst.msk [vmem:[#allocation3 + $0x8] sm:$0xff] %vm986, 0.0
        %989 = vst.msk [vmem:[#allocation3 + $0x10] sm:$0xff] %vm986, 0.0
        %vm990 = vcmask 146568
        %991 = vst.msk [vmem:[#allocation3] sm:$0xff] %vm990, 0.0
        %992 = vst.msk [vmem:[#allocation3 + $0x8] sm:$0xff] %vm990, 0.0
        %993 = vst.msk [vmem:[#allocation3 + $0x10] sm:$0xff] %vm990, 0.0
        %v994 = vld [vmem:[%s3] ss:$4 sm:$0x3]
        %v996 = vlaneseq
        %v997 = vshrl.u32 %v996, 7
        %v998 = vsub.s32 0, %v997
        %v999 = vrot.slane %v994, %v998
        %v1000 = vlaneseq
        %v1001 = vshrl.u32 %v1000, 7
        %v1002 = vsub.s32 1, %v1001
        %v1003 = vrot.slane %v994, %v1002
        %v1006 = vmul.f32 %v954, %v999
        %v1007 = vmul.f32 %v955, %v1003
        %v1008 = vmul.f32 %v956, %v999
        %v1009 = vmul.f32 %v957, %v1003
        %v1010 = vmul.f32 %v958, %v999
        %v1011 = vmul.f32 %v959, %v1003
        %v1012 = vmul.f32 %v960, %v999
        %v1013 = vmul.f32 %v961, %v1003
        %v1014 = vmul.f32 %v962, %v999
        %v1015 = vmul.f32 %v963, %v1003
        %v1016 = vmul.f32 %v964, %v999
        %v1017 = vmul.f32 %v965, %v1003
        %v1018 = vmul.f32 %v966, %v999
        %v1019 = vmul.f32 %v967, %v1003
        %v1020 = vmul.f32 %v968, %v999
        %v1021 = vmul.f32 %v969, %v1003
        %v1022 = vmul.f32 %v970, %v999
        %v1023 = vmul.f32 %v971, %v1003
        %v1024 = vmul.f32 %v972, %v999
        %v1025 = vmul.f32 %v973, %v1003
        %v1026 = vmul.f32 %v974, %v999
        %v1027 = vmul.f32 %v975, %v1003
        %v1028 = vmul.f32 %v976, %v999
        %v1029 = vmul.f32 %v977, %v1003
        %v1030 = vmul.f32 %v978, %v999
        %v1031 = vmul.f32 %v979, %v1003
        %v1032 = vmul.f32 %v980, %v999
        %v1033 = vmul.f32 %v981, %v1003
        %v1034 = vmul.f32 %v982, %v999
        %v1035 = vmul.f32 %v983, %v1003
        %v1036 = vmul.f32 %v984, %v999
        %v1037 = vmul.f32 %v985, %v1003
        %v1038 = vadd.f32 %v1006, %v1007
        %1039 = vadd.xlane.f32.xlu0 %v1038
        %v1040 = vpop.xlane.xlu0 %1039
        %v1041 = vadd.f32 %v1008, %v1009
        %1042 = vadd.xlane.f32.xlu0 %v1041
        %v1043 = vpop.xlane.xlu0 %1042
        %v1044 = vadd.f32 %v1010, %v1011
        %1045 = vadd.xlane.f32.xlu0 %v1044
        %v1046 = vpop.xlane.xlu0 %1045
        %v1047 = vadd.f32 %v1012, %v1013
        %1048 = vadd.xlane.f32.xlu0 %v1047
        %v1049 = vpop.xlane.xlu0 %1048
        %v1050 = vadd.f32 %v1014, %v1015
        %1051 = vadd.xlane.f32.xlu0 %v1050
        %v1052 = vpop.xlane.xlu0 %1051
        %v1053 = vadd.f32 %v1016, %v1017
        %1054 = vadd.xlane.f32.xlu0 %v1053
        %v1055 = vpop.xlane.xlu0 %1054
        %v1056 = vadd.f32 %v1018, %v1019
        %1057 = vadd.xlane.f32.xlu0 %v1056
        %v1058 = vpop.xlane.xlu0 %1057
        %v1059 = vadd.f32 %v1020, %v1021
        %1060 = vadd.xlane.f32.xlu0 %v1059
        %v1061 = vpop.xlane.xlu0 %1060
        %v1062 = vadd.f32 %v1022, %v1023
        %1063 = vadd.xlane.f32.xlu0 %v1062
        %v1064 = vpop.xlane.xlu0 %1063
        %v1065 = vadd.f32 %v1024, %v1025
        %1066 = vadd.xlane.f32.xlu0 %v1065
        %v1067 = vpop.xlane.xlu0 %1066
        %v1068 = vadd.f32 %v1026, %v1027
        %1069 = vadd.xlane.f32.xlu0 %v1068
        %v1070 = vpop.xlane.xlu0 %1069
        %v1071 = vadd.f32 %v1028, %v1029
        %1072 = vadd.xlane.f32.xlu0 %v1071
        %v1073 = vpop.xlane.xlu0 %1072
        %v1074 = vadd.f32 %v1030, %v1031
        %1075 = vadd.xlane.f32.xlu0 %v1074
        %v1076 = vpop.xlane.xlu0 %1075
        %v1077 = vadd.f32 %v1032, %v1033
        %1078 = vadd.xlane.f32.xlu0 %v1077
        %v1079 = vpop.xlane.xlu0 %1078
        %v1080 = vadd.f32 %v1034, %v1035
        %1081 = vadd.xlane.f32.xlu0 %v1080
        %v1082 = vpop.xlane.xlu0 %1081
        %v1083 = vadd.f32 %v1036, %v1037
        %1084 = vadd.xlane.f32.xlu0 %v1083
        %v1085 = vpop.xlane.xlu0 %1084
        %v1102 = vlaneseq
        %v1103 = vand.u32 %v1102, 127
        %v1104 = vadd.s32 %v1103, 4294967295
        %v1105 = vlaneseq
        %v1106 = vshrl.u32 %v1105, 7
        %v1107 = vsub.s32 %v1104, %v1106
        %v1108 = vrot.slane %v1040, %v1107
        %v1109 = vadd.s32 %v1103, 4294967287
        %v1110 = vlaneseq
        %v1111 = vshrl.u32 %v1110, 7
        %v1112 = vsub.s32 %v1109, %v1111
        %v1113 = vrot.slane %v1043, %v1112
        %vm1114 = vcmask 138312
        %v1115 = vsel %vm1114, %v1113, %v1108
        %v1116 = vlaneseq
        %v1117 = vshrl.u32 %v1116, 7
        %v1118 = vsub.s32 %v1104, %v1117
        %v1119 = vrot.slane %v1046, %v1118
        %v1120 = vlaneseq
        %v1121 = vshrl.u32 %v1120, 7
        %v1122 = vsub.s32 %v1109, %v1121
        %v1123 = vrot.slane %v1049, %v1122
        %v1124 = vsel %vm1114, %v1123, %v1119
        %v1125 = vlaneseq
        %v1126 = vshrl.u32 %v1125, 7
        %v1127 = vsub.s32 %v1104, %v1126
        %v1128 = vrot.slane %v1052, %v1127
        %v1129 = vlaneseq
        %v1130 = vshrl.u32 %v1129, 7
        %v1131 = vsub.s32 %v1109, %v1130
        %v1132 = vrot.slane %v1055, %v1131
        %v1133 = vsel %vm1114, %v1132, %v1128
        %v1134 = vlaneseq
        %v1135 = vshrl.u32 %v1134, 7
        %v1136 = vsub.s32 %v1104, %v1135
        %v1137 = vrot.slane %v1058, %v1136
        %v1138 = vlaneseq
        %v1139 = vshrl.u32 %v1138, 7
        %v1140 = vsub.s32 %v1109, %v1139
        %v1141 = vrot.slane %v1061, %v1140
        %v1142 = vsel %vm1114, %v1141, %v1137
        %v1143 = vlaneseq
        %v1144 = vshrl.u32 %v1143, 7
        %v1145 = vsub.s32 %v1104, %v1144
        %v1146 = vrot.slane %v1064, %v1145
        %v1147 = vlaneseq
        %v1148 = vshrl.u32 %v1147, 7
        %v1149 = vsub.s32 %v1109, %v1148
        %v1150 = vrot.slane %v1067, %v1149
        %v1151 = vsel %vm1114, %v1150, %v1146
        %v1152 = vlaneseq
        %v1153 = vshrl.u32 %v1152, 7
        %v1154 = vsub.s32 %v1104, %v1153
        %v1155 = vrot.slane %v1070, %v1154
        %v1156 = vlaneseq
        %v1157 = vshrl.u32 %v1156, 7
        %v1158 = vsub.s32 %v1109, %v1157
        %v1159 = vrot.slane %v1073, %v1158
        %v1160 = vsel %vm1114, %v1159, %v1155
        %v1161 = vlaneseq
        %v1162 = vshrl.u32 %v1161, 7
        %v1163 = vsub.s32 %v1104, %v1162
        %v1164 = vrot.slane %v1076, %v1163
        %v1165 = vlaneseq
        %v1166 = vshrl.u32 %v1165, 7
        %v1167 = vsub.s32 %v1109, %v1166
        %v1168 = vrot.slane %v1079, %v1167
        %v1169 = vsel %vm1114, %v1168, %v1164
        %v1170 = vlaneseq
        %v1171 = vshrl.u32 %v1170, 7
        %v1172 = vsub.s32 %v1104, %v1171
        %v1173 = vrot.slane %v1082, %v1172
        %v1174 = vlaneseq
        %v1175 = vshrl.u32 %v1174, 7
        %v1176 = vsub.s32 %v1109, %v1175
        %v1177 = vrot.slane %v1085, %v1176
        %v1178 = vsel %vm1114, %v1177, %v1173
        %vm1179 = vcmask 1041409
        %v1180 = vsel %vm1179, %v1124, %v1115
        %vm1181 = vcmask 1042434
        %v1182 = vsel %vm1181, %v1133, %v1180
        %vm1183 = vcmask 1043459
        %v1184 = vsel %vm1183, %v1142, %v1182
        %vm1185 = vcmask 1044484
        %v1186 = vsel %vm1185, %v1151, %v1184
        %vm1187 = vcmask 1045509
        %v1188 = vsel %vm1187, %v1160, %v1186
        %vm1189 = vcmask 1046534
        %v1190 = vsel %vm1189, %v1169, %v1188
        %vm1191 = vcmask 1047559
        %v1192 = vsel %vm1191, %v1178, %v1190
        %vm1194 = vcmask 138248
        %1195 = vst.msk [vmem:[#allocation3] sm:$0xff] %vm1194, %v1192
        %s1196 = scalar_lea.vmem %s3, 1
        %v1197 = vld [vmem:[%s1196] ss:$4 sm:$0x3]
        %v1199 = vlaneseq
        %v1200 = vshrl.u32 %v1199, 7
        %v1201 = vsub.s32 0, %v1200
        %v1202 = vrot.slane %v1197, %v1201
        %v1203 = vlaneseq
        %v1204 = vshrl.u32 %v1203, 7
        %v1205 = vsub.s32 1, %v1204
        %v1206 = vrot.slane %v1197, %v1205
        %v1209 = vmul.f32 %v954, %v1202
        %v1210 = vmul.f32 %v955, %v1206
        %v1211 = vmul.f32 %v956, %v1202
        %v1212 = vmul.f32 %v957, %v1206
        %v1213 = vmul.f32 %v958, %v1202
        %v1214 = vmul.f32 %v959, %v1206
        %v1215 = vmul.f32 %v960, %v1202
        %v1216 = vmul.f32 %v961, %v1206
        %v1217 = vmul.f32 %v962, %v1202
        %v1218 = vmul.f32 %v963, %v1206
        %v1219 = vmul.f32 %v964, %v1202
        %v1220 = vmul.f32 %v965, %v1206
        %v1221 = vmul.f32 %v966, %v1202
        %v1222 = vmul.f32 %v967, %v1206
        %v1223 = vmul.f32 %v968, %v1202
        %v1224 = vmul.f32 %v969, %v1206
        %v1225 = vmul.f32 %v970, %v1202
        %v1226 = vmul.f32 %v971, %v1206
        %v1227 = vmul.f32 %v972, %v1202
        %v1228 = vmul.f32 %v973, %v1206
        %v1229 = vmul.f32 %v974, %v1202
        %v1230 = vmul.f32 %v975, %v1206
        %v1231 = vmul.f32 %v976, %v1202
        %v1232 = vmul.f32 %v977, %v1206
        %v1233 = vmul.f32 %v978, %v1202
        %v1234 = vmul.f32 %v979, %v1206
        %v1235 = vmul.f32 %v980, %v1202
        %v1236 = vmul.f32 %v981, %v1206
        %v1237 = vmul.f32 %v982, %v1202
        %v1238 = vmul.f32 %v983, %v1206
        %v1239 = vmul.f32 %v984, %v1202
        %v1240 = vmul.f32 %v985, %v1206
        %v1241 = vadd.f32 %v1209, %v1210
        %1242 = vadd.xlane.f32.xlu0 %v1241
        %v1243 = vpop.xlane.xlu0 %1242
        %v1244 = vadd.f32 %v1211, %v1212
        %1245 = vadd.xlane.f32.xlu0 %v1244
        %v1246 = vpop.xlane.xlu0 %1245
        %v1247 = vadd.f32 %v1213, %v1214
        %1248 = vadd.xlane.f32.xlu0 %v1247
        %v1249 = vpop.xlane.xlu0 %1248
        %v1250 = vadd.f32 %v1215, %v1216
        %1251 = vadd.xlane.f32.xlu0 %v1250
        %v1252 = vpop.xlane.xlu0 %1251
        %v1253 = vadd.f32 %v1217, %v1218
        %1254 = vadd.xlane.f32.xlu0 %v1253
        %v1255 = vpop.xlane.xlu0 %1254
        %v1256 = vadd.f32 %v1219, %v1220
        %1257 = vadd.xlane.f32.xlu0 %v1256
        %v1258 = vpop.xlane.xlu0 %1257
        %v1259 = vadd.f32 %v1221, %v1222
        %1260 = vadd.xlane.f32.xlu0 %v1259
        %v1261 = vpop.xlane.xlu0 %1260
        %v1262 = vadd.f32 %v1223, %v1224
        %1263 = vadd.xlane.f32.xlu0 %v1262
        %v1264 = vpop.xlane.xlu0 %1263
        %v1265 = vadd.f32 %v1225, %v1226
        %1266 = vadd.xlane.f32.xlu0 %v1265
        %v1267 = vpop.xlane.xlu0 %1266
        %v1268 = vadd.f32 %v1227, %v1228
        %1269 = vadd.xlane.f32.xlu0 %v1268
        %v1270 = vpop.xlane.xlu0 %1269
        %v1271 = vadd.f32 %v1229, %v1230
        %1272 = vadd.xlane.f32.xlu0 %v1271
        %v1273 = vpop.xlane.xlu0 %1272
        %v1274 = vadd.f32 %v1231, %v1232
        %1275 = vadd.xlane.f32.xlu0 %v1274
        %v1276 = vpop.xlane.xlu0 %1275
        %v1277 = vadd.f32 %v1233, %v1234
        %1278 = vadd.xlane.f32.xlu0 %v1277
        %v1279 = vpop.xlane.xlu0 %1278
        %v1280 = vadd.f32 %v1235, %v1236
        %1281 = vadd.xlane.f32.xlu0 %v1280
        %v1282 = vpop.xlane.xlu0 %1281
        %v1283 = vadd.f32 %v1237, %v1238
        %1284 = vadd.xlane.f32.xlu0 %v1283
        %v1285 = vpop.xlane.xlu0 %1284
        %v1286 = vadd.f32 %v1239, %v1240
        %1287 = vadd.xlane.f32.xlu0 %v1286
        %v1288 = vpop.xlane.xlu0 %1287
        %v1305 = vlaneseq
        %v1306 = vshrl.u32 %v1305, 7
        %v1307 = vsub.s32 %v1104, %v1306
        %v1308 = vrot.slane %v1243, %v1307
        %v1309 = vlaneseq
        %v1310 = vshrl.u32 %v1309, 7
        %v1311 = vsub.s32 %v1109, %v1310
        %v1312 = vrot.slane %v1246, %v1311
        %v1313 = vsel %vm1114, %v1312, %v1308
        %v1314 = vlaneseq
        %v1315 = vshrl.u32 %v1314, 7
        %v1316 = vsub.s32 %v1104, %v1315
        %v1317 = vrot.slane %v1249, %v1316
        %v1318 = vlaneseq
        %v1319 = vshrl.u32 %v1318, 7
        %v1320 = vsub.s32 %v1109, %v1319
        %v1321 = vrot.slane %v1252, %v1320
        %v1322 = vsel %vm1114, %v1321, %v1317
        %v1323 = vlaneseq
        %v1324 = vshrl.u32 %v1323, 7
        %v1325 = vsub.s32 %v1104, %v1324
        %v1326 = vrot.slane %v1255, %v1325
        %v1327 = vlaneseq
        %v1328 = vshrl.u32 %v1327, 7
        %v1329 = vsub.s32 %v1109, %v1328
        %v1330 = vrot.slane %v1258, %v1329
        %v1331 = vsel %vm1114, %v1330, %v1326
        %v1332 = vlaneseq
        %v1333 = vshrl.u32 %v1332, 7
        %v1334 = vsub.s32 %v1104, %v1333
        %v1335 = vrot.slane %v1261, %v1334
        %v1336 = vlaneseq
        %v1337 = vshrl.u32 %v1336, 7
        %v1338 = vsub.s32 %v1109, %v1337
        %v1339 = vrot.slane %v1264, %v1338
        %v1340 = vsel %vm1114, %v1339, %v1335
        %v1341 = vlaneseq
        %v1342 = vshrl.u32 %v1341, 7
        %v1343 = vsub.s32 %v1104, %v1342
        %v1344 = vrot.slane %v1267, %v1343
        %v1345 = vlaneseq
        %v1346 = vshrl.u32 %v1345, 7
        %v1347 = vsub.s32 %v1109, %v1346
        %v1348 = vrot.slane %v1270, %v1347
        %v1349 = vsel %vm1114, %v1348, %v1344
        %v1350 = vlaneseq
        %v1351 = vshrl.u32 %v1350, 7
        %v1352 = vsub.s32 %v1104, %v1351
        %v1353 = vrot.slane %v1273, %v1352
        %v1354 = vlaneseq
        %v1355 = vshrl.u32 %v1354, 7
        %v1356 = vsub.s32 %v1109, %v1355
        %v1357 = vrot.slane %v1276, %v1356
        %v1358 = vsel %vm1114, %v1357, %v1353
        %v1359 = vlaneseq
        %v1360 = vshrl.u32 %v1359, 7
        %v1361 = vsub.s32 %v1104, %v1360
        %v1362 = vrot.slane %v1279, %v1361
        %v1363 = vlaneseq
        %v1364 = vshrl.u32 %v1363, 7
        %v1365 = vsub.s32 %v1109, %v1364
        %v1366 = vrot.slane %v1282, %v1365
        %v1367 = vsel %vm1114, %v1366, %v1362
        %v1368 = vlaneseq
        %v1369 = vshrl.u32 %v1368, 7
        %v1370 = vsub.s32 %v1104, %v1369
        %v1371 = vrot.slane %v1285, %v1370
        %v1372 = vlaneseq
        %v1373 = vshrl.u32 %v1372, 7
        %v1374 = vsub.s32 %v1109, %v1373
        %v1375 = vrot.slane %v1288, %v1374
        %v1376 = vsel %vm1114, %v1375, %v1371
        %v1377 = vsel %vm1179, %v1322, %v1313
        %v1378 = vsel %vm1181, %v1331, %v1377
        %v1379 = vsel %vm1183, %v1340, %v1378
        %v1380 = vsel %vm1185, %v1349, %v1379
        %v1381 = vsel %vm1187, %v1358, %v1380
        %v1382 = vsel %vm1189, %v1367, %v1381
        %v1383 = vsel %vm1191, %v1376, %v1382
        %s1385 = scalar_lea.vmem [#allocation3], 8
        %1386 = vst.msk [vmem:[%s1385] sm:$0xff] %vm1194, %v1383
        %s1387 = scalar_lea.vmem %s3, 2
        %v1388 = vld [vmem:[%s1387] ss:$4 sm:$0x3]
        %v1390 = vlaneseq
        %v1391 = vshrl.u32 %v1390, 7
        %v1392 = vsub.s32 0, %v1391
        %v1393 = vrot.slane %v1388, %v1392
        %v1394 = vlaneseq
        %v1395 = vshrl.u32 %v1394, 7
        %v1396 = vsub.s32 1, %v1395
        %v1397 = vrot.slane %v1388, %v1396
        %v1400 = vmul.f32 %v954, %v1393
        %v1401 = vmul.f32 %v955, %v1397
        %v1402 = vmul.f32 %v956, %v1393
        %v1403 = vmul.f32 %v957, %v1397
        %v1404 = vmul.f32 %v958, %v1393
        %v1405 = vmul.f32 %v959, %v1397
        %v1406 = vmul.f32 %v960, %v1393
        %v1407 = vmul.f32 %v961, %v1397
        %v1408 = vmul.f32 %v962, %v1393
        %v1409 = vmul.f32 %v963, %v1397
        %v1410 = vmul.f32 %v964, %v1393
        %v1411 = vmul.f32 %v965, %v1397
        %v1412 = vmul.f32 %v966, %v1393
        %v1413 = vmul.f32 %v967, %v1397
        %v1414 = vmul.f32 %v968, %v1393
        %v1415 = vmul.f32 %v969, %v1397
        %v1416 = vmul.f32 %v970, %v1393
        %v1417 = vmul.f32 %v971, %v1397
        %v1418 = vmul.f32 %v972, %v1393
        %v1419 = vmul.f32 %v973, %v1397
        %v1420 = vmul.f32 %v974, %v1393
        %v1421 = vmul.f32 %v975, %v1397
        %v1422 = vmul.f32 %v976, %v1393
        %v1423 = vmul.f32 %v977, %v1397
        %v1424 = vmul.f32 %v978, %v1393
        %v1425 = vmul.f32 %v979, %v1397
        %v1426 = vmul.f32 %v980, %v1393
        %v1427 = vmul.f32 %v981, %v1397
        %v1428 = vmul.f32 %v982, %v1393
        %v1429 = vmul.f32 %v983, %v1397
        %v1430 = vmul.f32 %v984, %v1393
        %v1431 = vmul.f32 %v985, %v1397
        %v1432 = vadd.f32 %v1400, %v1401
        %1433 = vadd.xlane.f32.xlu0 %v1432
        %v1434 = vpop.xlane.xlu0 %1433
        %v1435 = vadd.f32 %v1402, %v1403
        %1436 = vadd.xlane.f32.xlu0 %v1435
        %v1437 = vpop.xlane.xlu0 %1436
        %v1438 = vadd.f32 %v1404, %v1405
        %1439 = vadd.xlane.f32.xlu0 %v1438
        %v1440 = vpop.xlane.xlu0 %1439
        %v1441 = vadd.f32 %v1406, %v1407
        %1442 = vadd.xlane.f32.xlu0 %v1441
        %v1443 = vpop.xlane.xlu0 %1442
        %v1444 = vadd.f32 %v1408, %v1409
        %1445 = vadd.xlane.f32.xlu0 %v1444
        %v1446 = vpop.xlane.xlu0 %1445
        %v1447 = vadd.f32 %v1410, %v1411
        %1448 = vadd.xlane.f32.xlu0 %v1447
        %v1449 = vpop.xlane.xlu0 %1448
        %v1450 = vadd.f32 %v1412, %v1413
        %1451 = vadd.xlane.f32.xlu0 %v1450
        %v1452 = vpop.xlane.xlu0 %1451
        %v1453 = vadd.f32 %v1414, %v1415
        %1454 = vadd.xlane.f32.xlu0 %v1453
        %v1455 = vpop.xlane.xlu0 %1454
        %v1456 = vadd.f32 %v1416, %v1417
        %1457 = vadd.xlane.f32.xlu0 %v1456
        %v1458 = vpop.xlane.xlu0 %1457
        %v1459 = vadd.f32 %v1418, %v1419
        %1460 = vadd.xlane.f32.xlu0 %v1459
        %v1461 = vpop.xlane.xlu0 %1460
        %v1462 = vadd.f32 %v1420, %v1421
        %1463 = vadd.xlane.f32.xlu0 %v1462
        %v1464 = vpop.xlane.xlu0 %1463
        %v1465 = vadd.f32 %v1422, %v1423
        %1466 = vadd.xlane.f32.xlu0 %v1465
        %v1467 = vpop.xlane.xlu0 %1466
        %v1468 = vadd.f32 %v1424, %v1425
        %1469 = vadd.xlane.f32.xlu0 %v1468
        %v1470 = vpop.xlane.xlu0 %1469
        %v1471 = vadd.f32 %v1426, %v1427
        %1472 = vadd.xlane.f32.xlu0 %v1471
        %v1473 = vpop.xlane.xlu0 %1472
        %v1474 = vadd.f32 %v1428, %v1429
        %1475 = vadd.xlane.f32.xlu0 %v1474
        %v1476 = vpop.xlane.xlu0 %1475
        %v1477 = vadd.f32 %v1430, %v1431
        %1478 = vadd.xlane.f32.xlu0 %v1477
        %v1479 = vpop.xlane.xlu0 %1478
        %v1496 = vlaneseq
        %v1497 = vshrl.u32 %v1496, 7
        %v1498 = vsub.s32 %v1104, %v1497
        %v1499 = vrot.slane %v1434, %v1498
        %v1500 = vlaneseq
        %v1501 = vshrl.u32 %v1500, 7
        %v1502 = vsub.s32 %v1109, %v1501
        %v1503 = vrot.slane %v1437, %v1502
        %v1504 = vsel %vm1114, %v1503, %v1499
        %v1505 = vlaneseq
        %v1506 = vshrl.u32 %v1505, 7
        %v1507 = vsub.s32 %v1104, %v1506
        %v1508 = vrot.slane %v1440, %v1507
        %v1509 = vlaneseq
        %v1510 = vshrl.u32 %v1509, 7
        %v1511 = vsub.s32 %v1109, %v1510
        %v1512 = vrot.slane %v1443, %v1511
        %v1513 = vsel %vm1114, %v1512, %v1508
        %v1514 = vlaneseq
        %v1515 = vshrl.u32 %v1514, 7
        %v1516 = vsub.s32 %v1104, %v1515
        %v1517 = vrot.slane %v1446, %v1516
        %v1518 = vlaneseq
        %v1519 = vshrl.u32 %v1518, 7
        %v1520 = vsub.s32 %v1109, %v1519
        %v1521 = vrot.slane %v1449, %v1520
        %v1522 = vsel %vm1114, %v1521, %v1517
        %v1523 = vlaneseq
        %v1524 = vshrl.u32 %v1523, 7
        %v1525 = vsub.s32 %v1104, %v1524
        %v1526 = vrot.slane %v1452, %v1525
        %v1527 = vlaneseq
        %v1528 = vshrl.u32 %v1527, 7
        %v1529 = vsub.s32 %v1109, %v1528
        %v1530 = vrot.slane %v1455, %v1529
        %v1531 = vsel %vm1114, %v1530, %v1526
        %v1532 = vlaneseq
        %v1533 = vshrl.u32 %v1532, 7
        %v1534 = vsub.s32 %v1104, %v1533
        %v1535 = vrot.slane %v1458, %v1534
        %v1536 = vlaneseq
        %v1537 = vshrl.u32 %v1536, 7
        %v1538 = vsub.s32 %v1109, %v1537
        %v1539 = vrot.slane %v1461, %v1538
        %v1540 = vsel %vm1114, %v1539, %v1535
        %v1541 = vlaneseq
        %v1542 = vshrl.u32 %v1541, 7
        %v1543 = vsub.s32 %v1104, %v1542
        %v1544 = vrot.slane %v1464, %v1543
        %v1545 = vlaneseq
        %v1546 = vshrl.u32 %v1545, 7
        %v1547 = vsub.s32 %v1109, %v1546
        %v1548 = vrot.slane %v1467, %v1547
        %v1549 = vsel %vm1114, %v1548, %v1544
        %v1550 = vlaneseq
        %v1551 = vshrl.u32 %v1550, 7
        %v1552 = vsub.s32 %v1104, %v1551
        %v1553 = vrot.slane %v1470, %v1552
        %v1554 = vlaneseq
        %v1555 = vshrl.u32 %v1554, 7
        %v1556 = vsub.s32 %v1109, %v1555
        %v1557 = vrot.slane %v1473, %v1556
        %v1558 = vsel %vm1114, %v1557, %v1553
        %v1559 = vlaneseq
        %v1560 = vshrl.u32 %v1559, 7
        %v1561 = vsub.s32 %v1104, %v1560
        %v1562 = vrot.slane %v1476, %v1561
        %v1563 = vlaneseq
        %v1564 = vshrl.u32 %v1563, 7
        %v1565 = vsub.s32 %v1109, %v1564
        %v1566 = vrot.slane %v1479, %v1565
        %v1567 = vsel %vm1114, %v1566, %v1562
        %v1568 = vsel %vm1179, %v1513, %v1504
        %v1569 = vsel %vm1181, %v1522, %v1568
        %v1570 = vsel %vm1183, %v1531, %v1569
        %v1571 = vsel %vm1185, %v1540, %v1570
        %v1572 = vsel %vm1187, %v1549, %v1571
        %v1573 = vsel %vm1189, %v1558, %v1572
        %v1574 = vsel %vm1191, %v1567, %v1573
        %s1576 = scalar_lea.vmem [#allocation3], 16
        %1577 = vst.msk [vmem:[%s1576] sm:$0xff] %vm1194, %v1574
        %v1578 = vld [vmem:[#allocation3] sm:$0xff]
        %v1579 = vadd.f32 %v1578, 0.0
        %v1580 = vld [vmem:[%s1385] sm:$0xff]
        %1582 = vrot.lane.b32.xlu0 %v1580, 127
        %v1583 = vpop.permute.xlu0 %1582
        %v1585 = vadd.f32 %v1579, %v1583
        %v1586 = vld [vmem:[%s1576] sm:$0xff]
        %1588 = vrot.lane.b32.xlu0 %v1586, 126
        %v1589 = vpop.permute.xlu0 %1588
        %v1591 = vadd.f32 %v1585, %v1589
        %vm1592 = vcmask 130048
        %v1593 = vsel %vm1592, %v1591, -inf
        %1594 = vmax.xlane.f32.xlu0 %v1593
        %v1595 = vpop.xlane.xlu0 %1594
        %v1596 = vld [vmem:[#allocation4] sm:$0x1]
        %v1598 = vlaneseq
        %v1599 = vshrl.u32 %v1598, 7
        %v1600 = vsub.s32 0, %v1599
        %v1601 = vrot.slane %v1596, %v1600
        %v1603 = vadd.f32 %v1595, %v1601
        %1604 = vst.msk [vmem:[%s261] sm:$0xff] %vm986, %v1603
        %p1605 = scmp.lt.s32.totalorder %s22, 2
        %s1606 = scalar_select %p1605, %s22, 2
        %s1607 = smul.addr %s1606, 8
        %s1608 = scalar_lea.vmem %s5, %s1607
        // Predicated region
        $region49: #{tpu_custom_call.1} parent=39 // pred_check
          %p1609 = pneg %p150
        $region50: #{tpu_custom_call.1} parent=39 // pred_check_branch
          %1611 = sbr.rel (%p1609) target = $region52
        $region51: #{tpu_custom_call.1} parent=39 // pred_region
          _
        $region52: #{tpu_custom_call.1} parent=39 // pred_fallthru
          _
      $region40: #{tpu_custom_call.1} parent=5 // pred_fallthru
        _
      %p1612 = scmp.le.s32.totalorder 2, %s17
      // Predicated region
      $region53: #{tpu_custom_call.1} parent=5 // pred_check
        %p1613 = pneg %p1612
      $region54: #{tpu_custom_call.1} parent=5 // pred_check_branch
        %1615 = sbr.rel (%p1613) target = $region56
      $region55: #{tpu_custom_call.1} parent=5 // pred_region
        %s1616 = ssub.s32 %s17, 2
        // Predicated region
        $region57: #{tpu_custom_call.1} parent=55 // pred_check
          %p1617 = pneg %p156
        $region58: #{tpu_custom_call.1} parent=55 // pred_check_branch
          %1619 = sbr.rel (%p1617) target = $region60
        $region59: #{tpu_custom_call.1} parent=55 // pred_region
          %p1620 = scmp.lt.s32.totalorder %s23, 2
          %s1621 = scalar_select %p1620, %s23, 2
          %s1622 = smul.addr %s1621, 8
          %s1623 = scalar_lea.vmem %s5, %s1622
        $region60: #{tpu_custom_call.1} parent=55 // pred_fallthru
          _
      $region56: #{tpu_custom_call.1} parent=5 // pred_fallthru
        _
    $region6: #{tpu_custom_call.1} parent=1 // loop_footer
      %s21 = sadd.s32 1, %s17
    $region7: #{tpu_custom_call.1} parent=1 // loop_footer_branch
      %16 = sbr.rel target = $region3
    $region8: #{tpu_custom_call.1} parent=1 // loop_exit
      _
    %1624 = vsyncpa [#allocation6], 1
    %s1625 = scalar_lea.sflag [#allocation6], 1
    %1626 = vsyncpa %s1625, 1
    %1627 = vsyncpa [#allocation8], 1

</llo_original>
